<compile_context>
chip_gen: v7x
topology: tpu7x:2x2x1
jax: 0.10.0
libtpu: 0.0.40
codegen_flags: <defaults>
</compile_context>

<pallas_src>
import jax
import jax.numpy as jnp
from jax import lax
from jax.experimental import pallas as pl
from jax.experimental.pallas import tpu as pltpu

LN_EPS = 1e-5  # PyTorch nn.LayerNorm default


def _lane_group(num_classes, channels):
    """How many j indices to pack into the 128-wide lane axis."""
    g = max(1, min(128 // channels if channels <= 128 else 1, num_classes))
    g = 1 << (g.bit_length() - 1)          # power of two (for the roll tree)
    while num_classes % g:
        g //= 2
    return g


def make_fused_gnn_kernel(num_classes, channels, group):
    N, C, G = num_classes, channels, group
    GC, NG = G * C, N // G
    R = N * NG                              # packed edge rows per batch element
    inv_n = 1.0 / float(N)

    def seg_bcast_sum(a):
        # Sum over the G lane groups (lanes congruent mod C); the result is
        # broadcast back into every group.  log2(G) rolls + adds (XLU + VPU).
        s = C
        while s < GC:
            a = a + pltpu.roll(a, s, axis=1)
            s *= 2
        return a

    def kernel(x_in, e_in, w_iu, b_iu, w_jp, b_jv, w_ebd, b_et,
               ge, be, gv, bv, sseg, perm, x_st, e_st):
        layer = pl.program_id(1)

        # Initialise the per-batch state in the (VMEM-resident) output blocks.
        @pl.when(layer == 0)
        def _():
            x_st[...] = x_in[...]
            e_st[...] = e_in[...]

        x = x_st[...]            # (N, C)   node state
        ep = e_st[...]           # (R, GC)  edge state, G j-indices per row

        # ---- node projections: one lane-dense MXU pass for [A tiled | U] ----
        proj = jnp.dot(x, w_iu[...], preferred_element_type=jnp.float32) + b_iu[...]
        vix_t = proj[:, :GC]     # A(x), tiled Gx along lanes          (N, GC)
        uix = proj[:, GC:]       # U(x)                                (N, C)

        # B(x), V(x) in the j-packed lane layout: regroup rows of x with a
        # constant permutation matmul, then one block-placed matmul per group.
        px = jnp.dot(perm[...], x, preferred_element_type=jnp.float32)
        w_jp_v = w_jp[...]
        pj = b_jv[...]
        for g in range(G):
            pj = pj + jnp.dot(px[g * NG:(g + 1) * NG, :],
                              w_jp_v[g * C:(g + 1) * C, :],
                              preferred_element_type=jnp.float32)
        vjx_p = pj[:, :GC]       # B(x), packed                        (NG, GC)
        ujx_p = pj[:, GC:]       # V(x), packed                        (NG, GC)

        # ---- edge update (block-diagonal E projection keeps lanes dense) ----
        ee = jnp.dot(ep, w_ebd[...], preferred_element_type=jnp.float32) + b_et[...]
        pre = (vix_t[:, None, :] + vjx_p[None, :, :]
               + ee.reshape(N, NG, GC)).reshape(R, GC)
        # Per-pair LayerNorm: segmented (C-lane) mean / E[(x-mu)^2] via one
        # constant block matmul each on the MXU; rsqrt on the EUP.
        mu = jnp.dot(pre, sseg[...], preferred_element_type=jnp.float32)
        xm = pre - mu
        var = jnp.dot(xm * xm, sseg[...], preferred_element_type=jnp.float32)
        ln_e = xm * lax.rsqrt(var + LN_EPS)
        e_new = ep + jnp.maximum(ln_e * ge[...] + be[...], 0.0)
        e_st[...] = e_new

        # ---- gated softmax over j + aggregation onto the end nodes ----------
        # sum_j softmax(sigmoid(e)) * V(x_j) == (sum_j exp*V) * recip(sum_j exp)
        # so the softmax tensor is never materialised.
        exp_e = jnp.exp(jax.nn.sigmoid(e_new)).reshape(N, NG, GC)
        s_den = jnp.sum(exp_e, axis=1)                            # (N, GC)
        s_num = jnp.sum(exp_e * ujx_p[None, :, :], axis=1)        # (N, GC)
        den = seg_bcast_sum(s_den)
        num = seg_bcast_sum(s_num)
        agg = (num * pl.reciprocal(den, approx=False))[:, :C]     # (N, C)

        # ---- node update ------------------------------------------------------
        xn = uix + agg * inv_n
        mu_v = jnp.mean(xn, axis=-1, keepdims=True)
        var_v = jnp.mean((xn - mu_v) ** 2, axis=-1, keepdims=True)
        ln_v = (xn - mu_v) * lax.rsqrt(var_v + LN_EPS)
        x_st[...] = x + jnp.maximum(ln_v * gv[...] + bv[...], 0.0)

    return kernel


def gnn_forward_pallas(x, edge, layer_params, num_classes):
    B, N, C = x.shape
    assert N == num_classes
    NN = N * N
    L = len(layer_params)
    G = _lane_group(N, C)
    GC, NG = G * C, N // G
    R = NN // G

    eye_g = jnp.eye(G, dtype=jnp.float32)

    def bdiag(w):                      # blockdiag(w, ..., w)  (GC, GC)
        return jnp.kron(eye_g, w)

    def tile_lane(v):                  # (1, C) -> (1, GC)
        return jnp.tile(v, (1, G))

    # Per-layer weights packed for the lane-dense layout (leading layer axis).
    w_iu = jnp.stack([jnp.concatenate([p["wA"]] * G + [p["wU"]], axis=1)
                      for p in layer_params])                        # (L, C, (G+1)C)
    b_iu = jnp.stack([jnp.concatenate([p["bA"]] * G + [p["bU"]], axis=1)
                      for p in layer_params])                        # (L, 1, (G+1)C)
    w_jp = jnp.stack([jnp.concatenate([bdiag(p["wB"]), bdiag(p["wV"])], axis=1)
                      for p in layer_params])                        # (L, GC, 2GC)
    b_jv = jnp.stack([jnp.concatenate([tile_lane(p["bB"]), tile_lane(p["bV"])], axis=1)
                      for p in layer_params])                        # (L, 1, 2GC)
    w_e = jnp.stack([bdiag(p["wE"]) for p in layer_params])          # (L, GC, GC)
    b_e = jnp.stack([tile_lane(p["bE"]) for p in layer_params])      # (L, 1, GC)
    g_e = jnp.stack([tile_lane(p["ge"]) for p in layer_params])      # (L, 1, GC)
    beta_e = jnp.stack([tile_lane(p["betae"]) for p in layer_params])
    g_v = jnp.stack([p["gv"] for p in layer_params])                 # (L, 1, C)
    beta_v = jnp.stack([p["betav"] for p in layer_params])

    # Constants: segmented-mean block matrix + row regrouping permutation.
    sseg = jnp.kron(eye_g, jnp.ones((C, C), jnp.float32) / float(C))  # (GC, GC)
    rows = jnp.arange(N)
    perm = jnp.zeros((N, N), jnp.float32).at[
        rows, (rows % NG) * G + rows // NG].set(1.0)

    # j-packed edge layout is a pure reshape of the (B, N*N, C) buffer.
    e_p = edge.reshape(B, R, GC)

    def per_b(shape):
        return pl.BlockSpec((None,) + shape, lambda b, l: (b, 0, 0))

    def per_l(shape):
        return pl.BlockSpec((None,) + shape, lambda b, l: (l, 0, 0))

    def const(shape):
        return pl.BlockSpec(shape, lambda b, l: (0, 0))

    in_specs = [
        per_b((N, C)),             # x0 (read only at layer 0)
        per_b((R, GC)),            # edge0 (packed, read only at layer 0)
        per_l((C, (G + 1) * C)),   # [A x G | U] weight
        per_l((1, (G + 1) * C)),   # [A x G | U] bias
        per_l((GC, 2 * GC)),       # [blockdiag(B) | blockdiag(V)]
        per_l((1, 2 * GC)),        # [B bias x G | V bias x G]
        per_l((GC, GC)),           # blockdiag(E)
        per_l((1, GC)),            # E bias (tiled)
        per_l((1, GC)),            # bne gamma (tiled)
        per_l((1, GC)),            # bne beta (tiled)
        per_l((1, C)),             # bnv gamma
        per_l((1, C)),             # bnv beta
        const((GC, GC)),           # segmented-mean block matrix
        const((N, N)),             # row regrouping permutation
    ]
    out_specs = (per_b((N, C)), per_b((R, GC)))
    out_shape = (jax.ShapeDtypeStruct((B, N, C), x.dtype),
                 jax.ShapeDtypeStruct((B, R, GC), edge.dtype))

    fn = pl.pallas_call(
        make_fused_gnn_kernel(N, C, G),
        out_shape=out_shape,
        grid_spec=pltpu.PrefetchScalarGridSpec(
            num_scalar_prefetch=0,
            grid=(B, L),
            in_specs=in_specs,
            out_specs=out_specs,
        ),
        compiler_params=pltpu.CompilerParams(
            dimension_semantics=("parallel", "arbitrary"),
            vmem_limit_bytes=32 * 1024 * 1024),
    )
    x_out, e_out = fn(x, e_p, w_iu, b_iu, w_jp, b_jv, w_e, b_e,
                      g_e, beta_e, g_v, beta_v, sseg, perm)
    return x_out, e_out.reshape(B, NN, C)


def init_gnn_params(key, in_channels, num_layers):
    C = in_channels
    scale = (2.0 / C) ** 0.5              # init_weights_linear, gain = 1
    bound = 1.0 / (C ** 0.5)              # PyTorch default Linear bias init range
    layers = []
    for _ in range(num_layers):
        p = {}
        for name in ("A", "B", "E", "U", "V"):
            key, kw, kb = jax.random.split(key, 3)
            # stored as (C_in, C_out), i.e. already transposed vs torch (out, in)
            p["w" + name] = scale * jax.random.normal(kw, (C, C), jnp.float32)
            p["b" + name] = jax.random.uniform(kb, (1, C), jnp.float32, -bound, bound)
        p["gv"] = jnp.ones((1, C), jnp.float32)      # bnv weight = 1
        p["betav"] = jnp.zeros((1, C), jnp.float32)  # bnv bias = 0
        p["ge"] = jnp.ones((1, C), jnp.float32)      # bne weight = 1
        p["betae"] = jnp.zeros((1, C), jnp.float32)  # bne bias = 0
        layers.append(p)
    return layers


def create_e_matrices(n, dtype=jnp.float32):
    eye = jnp.eye(n, dtype=dtype)
    start_m = jnp.tile(eye, (n, 1))        # start[i*n + j, j] = 1
    end_m = jnp.repeat(eye, n, axis=0)     # end[i*n + j, i] = 1
    return start_m, end_m


def gnn_forward_ref(x, edge, layer_params, num_classes):
    """Pure-JAX reference mirroring the PyTorch forward exactly."""
    N = num_classes
    start_m, end_m = create_e_matrices(N, x.dtype)

    def ln(v):
        mu = v.mean(-1, keepdims=True)
        var = ((v - mu) ** 2).mean(-1, keepdims=True)
        return (v - mu) / jnp.sqrt(var + LN_EPS)

    for p in layer_params:
        B, _, C = x.shape
        res = x
        Vix = x @ p["wA"] + p["bA"]
        Vjx = x @ p["wB"] + p["bB"]
        Ee = edge @ p["wE"] + p["bE"]
        pre = (jnp.einsum("ev,bvc->bec", end_m, Vix)
               + jnp.einsum("ev,bvc->bec", start_m, Vjx) + Ee)
        edge = edge + jax.nn.relu(ln(pre) * p["ge"] + p["betae"])
        e = jax.nn.sigmoid(edge)
        e = jax.nn.softmax(e.reshape(B, N, N, C), axis=2).reshape(B, N * N, C)
        Ujx = jnp.einsum("ev,bvc->bec", start_m, x @ p["wV"] + p["bV"])
        Uix = x @ p["wU"] + p["bU"]
        xn = Uix + jnp.einsum("ve,bec->bvc", end_m.T, e * Ujx) / N
        x = res + jax.nn.relu(ln(xn) * p["gv"] + p["betav"])
    return x, edge


if __name__ == "__main__":
    B = 2
    in_channels = 32
    num_classes = 8
    layer_num = 2

    key = jax.random.PRNGKey(0)
    kx, ke, kp = jax.random.split(key, 3)
    x = jax.random.normal(kx, (B, num_classes, in_channels), jnp.float32)
    edge = jax.random.normal(ke, (B, num_classes * num_classes, in_channels), jnp.float32)
    params = init_gnn_params(kp, in_channels, layer_num)

    x_out, edge_out = gnn_forward_pallas(x, edge, params, num_classes)
    x_out = jax.block_until_ready(x_out)
    edge_out = jax.block_until_ready(edge_out)

    x_ref, edge_ref = gnn_forward_ref(x, edge, params, num_classes)
    assert jnp.allclose(x_out, x_ref, atol=2e-4, rtol=2e-4), "x mismatch"
    assert jnp.allclose(edge_out, edge_ref, atol=2e-4, rtol=2e-4), "edge mismatch"

    print("KERNEL_OK")
</pallas_src>

<mosaic_0001>
module attributes {stable_mosaic.version = 11 : i64} {
  func.func @kernel(%arg0: i32, %arg1: i32, %arg2: memref<1x8x32xf32, #tpu.memory_space<vmem>>, %arg3: memref<1x16x128xf32, #tpu.memory_space<vmem>>, %arg4: memref<1x32x160xf32, #tpu.memory_space<vmem>>, %arg5: memref<1x1x160xf32, #tpu.memory_space<vmem>>, %arg6: memref<1x128x256xf32, #tpu.memory_space<vmem>>, %arg7: memref<1x1x256xf32, #tpu.memory_space<vmem>>, %arg8: memref<1x128x128xf32, #tpu.memory_space<vmem>>, %arg9: memref<1x1x128xf32, #tpu.memory_space<vmem>>, %arg10: memref<1x1x128xf32, #tpu.memory_space<vmem>>, %arg11: memref<1x1x128xf32, #tpu.memory_space<vmem>>, %arg12: memref<1x1x32xf32, #tpu.memory_space<vmem>>, %arg13: memref<1x1x32xf32, #tpu.memory_space<vmem>>, %arg14: memref<128x128xf32, #tpu.memory_space<vmem>>, %arg15: memref<8x8xf32, #tpu.memory_space<vmem>>, %arg16: memref<1x8x32xf32, #tpu.memory_space<vmem>>, %arg17: memref<1x16x128xf32, #tpu.memory_space<vmem>>) attributes {dimension_semantics = [#tpu.dimension_semantics<parallel>, #tpu.dimension_semantics<arbitrary>], iteration_bounds = array<i64: 2, 2>, scalar_prefetch = 0 : i64, scratch_operands = 0 : i64, tpu.core_type = #tpu.core_type<tc>, window_params = [{transform_indices = @transform_0, window_bounds = array<i64: 1, 8, 32>}, {transform_indices = @transform_1, window_bounds = array<i64: 1, 16, 128>}, {transform_indices = @transform_2, window_bounds = array<i64: 1, 32, 160>}, {transform_indices = @transform_3, window_bounds = array<i64: 1, 1, 160>}, {transform_indices = @transform_4, window_bounds = array<i64: 1, 128, 256>}, {transform_indices = @transform_5, window_bounds = array<i64: 1, 1, 256>}, {transform_indices = @transform_6, window_bounds = array<i64: 1, 128, 128>}, {transform_indices = @transform_7, window_bounds = array<i64: 1, 1, 128>}, {transform_indices = @transform_8, window_bounds = array<i64: 1, 1, 128>}, {transform_indices = @transform_9, window_bounds = array<i64: 1, 1, 128>}, {transform_indices = @transform_10, window_bounds = array<i64: 1, 1, 32>}, {transform_indices = @transform_11, window_bounds = array<i64: 1, 1, 32>}, {pipeline_mode = #tpu.pipeline_mode<synchronous>, transform_indices = @transform_12, window_bounds = array<i64: 128, 128>}, {pipeline_mode = #tpu.pipeline_mode<synchronous>, transform_indices = @transform_13, window_bounds = array<i64: 8, 8>}, {transform_indices = @transform_14, window_bounds = array<i64: 1, 8, 32>}, {transform_indices = @transform_15, window_bounds = array<i64: 1, 16, 128>}]} {
    %c0_i32 = arith.constant 0 : i32
    %0 = arith.cmpi eq, %arg1, %c0_i32 : i32
    %1 = arith.extui %0 : i1 to i32
    %c0_i32_0 = arith.constant 0 : i32
    %2 = arith.cmpi ne, %1, %c0_i32_0 : i32
    scf.if %2 {
      %c0_70 = arith.constant 0 : index
      %c0_71 = arith.constant 0 : index
      %c0_72 = arith.constant 0 : index
      %138 = vector.load %arg2[%c0_70, %c0_71, %c0_72] : memref<1x8x32xf32, #tpu.memory_space<vmem>>, vector<1x8x32xf32>
      %139 = vector.shape_cast %138 : vector<1x8x32xf32> to vector<8x32xf32>
      %c0_73 = arith.constant 0 : index
      %c0_74 = arith.constant 0 : index
      %c0_75 = arith.constant 0 : index
      %140 = vector.load %arg16[%c0_73, %c0_74, %c0_75] : memref<1x8x32xf32, #tpu.memory_space<vmem>>, vector<1x8x32xf32>
      %141 = vector.shape_cast %140 : vector<1x8x32xf32> to vector<8x32xf32>
      %142 = vector.shape_cast %139 : vector<8x32xf32> to vector<1x8x32xf32>
      tpu.vector_store %arg16[%c0_73, %c0_74, %c0_75], %142 {strides = array<i32>} : memref<1x8x32xf32, #tpu.memory_space<vmem>>, vector<1x8x32xf32>,
      %c0_76 = arith.constant 0 : index
      %c0_77 = arith.constant 0 : index
      %c0_78 = arith.constant 0 : index
      %143 = vector.load %arg3[%c0_76, %c0_77, %c0_78] : memref<1x16x128xf32, #tpu.memory_space<vmem>>, vector<1x16x128xf32>
      %144 = vector.shape_cast %143 : vector<1x16x128xf32> to vector<16x128xf32>
      %c0_79 = arith.constant 0 : index
      %c0_80 = arith.constant 0 : index
      %c0_81 = arith.constant 0 : index
      %145 = vector.load %arg17[%c0_79, %c0_80, %c0_81] : memref<1x16x128xf32, #tpu.memory_space<vmem>>, vector<1x16x128xf32>
      %146 = vector.shape_cast %145 : vector<1x16x128xf32> to vector<16x128xf32>
      %147 = vector.shape_cast %144 : vector<16x128xf32> to vector<1x16x128xf32>
      tpu.vector_store %arg17[%c0_79, %c0_80, %c0_81], %147 {strides = array<i32>} : memref<1x16x128xf32, #tpu.memory_space<vmem>>, vector<1x16x128xf32>,
    } else {
    }
    %c0 = arith.constant 0 : index
    %c0_1 = arith.constant 0 : index
    %c0_2 = arith.constant 0 : index
    %3 = vector.load %arg16[%c0, %c0_1, %c0_2] : memref<1x8x32xf32, #tpu.memory_space<vmem>>, vector<1x8x32xf32>
    %4 = vector.shape_cast %3 : vector<1x8x32xf32> to vector<8x32xf32>
    %c0_3 = arith.constant 0 : index
    %c0_4 = arith.constant 0 : index
    %c0_5 = arith.constant 0 : index
    %5 = vector.load %arg17[%c0_3, %c0_4, %c0_5] : memref<1x16x128xf32, #tpu.memory_space<vmem>>, vector<1x16x128xf32>
    %6 = vector.shape_cast %5 : vector<1x16x128xf32> to vector<16x128xf32>
    %c0_6 = arith.constant 0 : index
    %c0_7 = arith.constant 0 : index
    %c0_8 = arith.constant 0 : index
    %7 = vector.load %arg4[%c0_6, %c0_7, %c0_8] : memref<1x32x160xf32, #tpu.memory_space<vmem>>, vector<1x32x160xf32>
    %8 = vector.shape_cast %7 : vector<1x32x160xf32> to vector<32x160xf32>
    %cst = arith.constant dense<0.000000e+00> : vector<8x160xf32>
    %9 = tpu.matmul %4, %8, %cst {dimension_numbers = #tpu.dot_dimension_numbers<[1], [0], [0], [1], [0, 0, 1, 1], [], []>} : vector<8x32xf32>, vector<32x160xf32>, vector<8x160xf32> -> vector<8x160xf32>
    %c0_9 = arith.constant 0 : index
    %c0_10 = arith.constant 0 : index
    %c0_11 = arith.constant 0 : index
    %10 = vector.load %arg5[%c0_9, %c0_10, %c0_11] : memref<1x1x160xf32, #tpu.memory_space<vmem>>, vector<1x1x160xf32>
    %11 = vector.shape_cast %10 : vector<1x1x160xf32> to vector<1x160xf32>
    %12 = vector.broadcast %11 : vector<1x160xf32> to vector<8x160xf32>
    %13 = arith.addf %9, %12 : vector<8x160xf32>
    %14 = vector.extract_strided_slice %13 {offsets = [0, 0], sizes = [8, 128], strides = [1, 1]} : vector<8x160xf32> to vector<8x128xf32>
    %15 = vector.extract_strided_slice %13 {offsets = [0, 128], sizes = [8, 32], strides = [1, 1]} : vector<8x160xf32> to vector<8x32xf32>
    %c0_12 = arith.constant 0 : index
    %c0_13 = arith.constant 0 : index
    %16 = vector.load %arg15[%c0_12, %c0_13] : memref<8x8xf32, #tpu.memory_space<vmem>>, vector<8x8xf32>
    %cst_14 = arith.constant dense<0.000000e+00> : vector<8x32xf32>
    %17 = tpu.matmul %16, %4, %cst_14 {dimension_numbers = #tpu.dot_dimension_numbers<[1], [0], [0], [1], [0, 0, 1, 1], [], []>} : vector<8x8xf32>, vector<8x32xf32>, vector<8x32xf32> -> vector<8x32xf32>
    %c0_15 = arith.constant 0 : index
    %c0_16 = arith.constant 0 : index
    %c0_17 = arith.constant 0 : index
    %18 = vector.load %arg6[%c0_15, %c0_16, %c0_17] : memref<1x128x256xf32, #tpu.memory_space<vmem>>, vector<1x128x256xf32>
    %19 = vector.shape_cast %18 : vector<1x128x256xf32> to vector<128x256xf32>
    %c0_18 = arith.constant 0 : index
    %c0_19 = arith.constant 0 : index
    %c0_20 = arith.constant 0 : index
    %20 = vector.load %arg7[%c0_18, %c0_19, %c0_20] : memref<1x1x256xf32, #tpu.memory_space<vmem>>, vector<1x1x256xf32>
    %21 = vector.shape_cast %20 : vector<1x1x256xf32> to vector<1x256xf32>
    %22 = vector.extract_strided_slice %17 {offsets = [0, 0], sizes = [2, 32], strides = [1, 1]} : vector<8x32xf32> to vector<2x32xf32>
    %23 = vector.extract_strided_slice %19 {offsets = [0, 0], sizes = [32, 256], strides = [1, 1]} : vector<128x256xf32> to vector<32x256xf32>
    %cst_21 = arith.constant dense<0.000000e+00> : vector<2x256xf32>
    %24 = tpu.matmul %22, %23, %cst_21 {dimension_numbers = #tpu.dot_dimension_numbers<[1], [0], [0], [1], [0, 0, 1, 1], [], []>} : vector<2x32xf32>, vector<32x256xf32>, vector<2x256xf32> -> vector<2x256xf32>
    %25 = vector.broadcast %21 : vector<1x256xf32> to vector<2x256xf32>
    %26 = arith.addf %25, %24 : vector<2x256xf32>
    %27 = vector.extract_strided_slice %17 {offsets = [2, 0], sizes = [2, 32], strides = [1, 1]} : vector<8x32xf32> to vector<2x32xf32>
    %28 = vector.extract_strided_slice %19 {offsets = [32, 0], sizes = [32, 256], strides = [1, 1]} : vector<128x256xf32> to vector<32x256xf32>
    %cst_22 = arith.constant dense<0.000000e+00> : vector<2x256xf32>
    %29 = tpu.matmul %27, %28, %cst_22 {dimension_numbers = #tpu.dot_dimension_numbers<[1], [0], [0], [1], [0, 0, 1, 1], [], []>} : vector<2x32xf32>, vector<32x256xf32>, vector<2x256xf32> -> vector<2x256xf32>
    %30 = arith.addf %26, %29 : vector<2x256xf32>
    %31 = vector.extract_strided_slice %17 {offsets = [4, 0], sizes = [2, 32], strides = [1, 1]} : vector<8x32xf32> to vector<2x32xf32>
    %32 = vector.extract_strided_slice %19 {offsets = [64, 0], sizes = [32, 256], strides = [1, 1]} : vector<128x256xf32> to vector<32x256xf32>
    %cst_23 = arith.constant dense<0.000000e+00> : vector<2x256xf32>
    %33 = tpu.matmul %31, %32, %cst_23 {dimension_numbers = #tpu.dot_dimension_numbers<[1], [0], [0], [1], [0, 0, 1, 1], [], []>} : vector<2x32xf32>, vector<32x256xf32>, vector<2x256xf32> -> vector<2x256xf32>
    %34 = arith.addf %30, %33 : vector<2x256xf32>
    %35 = vector.extract_strided_slice %17 {offsets = [6, 0], sizes = [2, 32], strides = [1, 1]} : vector<8x32xf32> to vector<2x32xf32>
    %36 = vector.extract_strided_slice %19 {offsets = [96, 0], sizes = [32, 256], strides = [1, 1]} : vector<128x256xf32> to vector<32x256xf32>
    %cst_24 = arith.constant dense<0.000000e+00> : vector<2x256xf32>
    %37 = tpu.matmul %35, %36, %cst_24 {dimension_numbers = #tpu.dot_dimension_numbers<[1], [0], [0], [1], [0, 0, 1, 1], [], []>} : vector<2x32xf32>, vector<32x256xf32>, vector<2x256xf32> -> vector<2x256xf32>
    %38 = arith.addf %34, %37 : vector<2x256xf32>
    %39 = vector.extract_strided_slice %38 {offsets = [0, 0], sizes = [2, 128], strides = [1, 1]} : vector<2x256xf32> to vector<2x128xf32>
    %40 = vector.extract_strided_slice %38 {offsets = [0, 128], sizes = [2, 128], strides = [1, 1]} : vector<2x256xf32> to vector<2x128xf32>
    %c0_25 = arith.constant 0 : index
    %c0_26 = arith.constant 0 : index
    %c0_27 = arith.constant 0 : index
    %41 = vector.load %arg8[%c0_25, %c0_26, %c0_27] : memref<1x128x128xf32, #tpu.memory_space<vmem>>, vector<1x128x128xf32>
    %42 = vector.shape_cast %41 : vector<1x128x128xf32> to vector<128x128xf32>
    %cst_28 = arith.constant dense<0.000000e+00> : vector<16x128xf32>
    %43 = tpu.matmul %6, %42, %cst_28 {dimension_numbers = #tpu.dot_dimension_numbers<[1], [0], [0], [1], [0, 0, 1, 1], [], []>} : vector<16x128xf32>, vector<128x128xf32>, vector<16x128xf32> -> vector<16x128xf32>
    %c0_29 = arith.constant 0 : index
    %c0_30 = arith.constant 0 : index
    %c0_31 = arith.constant 0 : index
    %44 = vector.load %arg9[%c0_29, %c0_30, %c0_31] : memref<1x1x128xf32, #tpu.memory_space<vmem>>, vector<1x1x128xf32>
    %45 = vector.shape_cast %44 : vector<1x1x128xf32> to vector<1x128xf32>
    %46 = vector.broadcast %45 : vector<1x128xf32> to vector<16x128xf32>
    %47 = arith.addf %43, %46 : vector<16x128xf32>
    %48 = vector.shape_cast %14 : vector<8x128xf32> to vector<8x1x128xf32>
    %49 = vector.shape_cast %39 : vector<2x128xf32> to vector<1x2x128xf32>
    %50 = vector.broadcast %48 : vector<8x1x128xf32> to vector<8x2x128xf32>
    %51 = vector.broadcast %49 : vector<1x2x128xf32> to vector<8x2x128xf32>
    %52 = arith.addf %50, %51 : vector<8x2x128xf32>
    %53 = vector.shape_cast %47 : vector<16x128xf32> to vector<8x2x128xf32>
    %54 = arith.addf %52, %53 : vector<8x2x128xf32>
    %55 = vector.shape_cast %54 : vector<8x2x128xf32> to vector<16x128xf32>
    %c0_32 = arith.constant 0 : index
    %c0_33 = arith.constant 0 : index
    %56 = vector.load %arg14[%c0_32, %c0_33] : memref<128x128xf32, #tpu.memory_space<vmem>>, vector<128x128xf32>
    %cst_34 = arith.constant dense<0.000000e+00> : vector<16x128xf32>
    %57 = tpu.matmul %55, %56, %cst_34 {dimension_numbers = #tpu.dot_dimension_numbers<[1], [0], [0], [1], [0, 0, 1, 1], [], []>} : vector<16x128xf32>, vector<128x128xf32>, vector<16x128xf32> -> vector<16x128xf32>
    %58 = arith.subf %55, %57 : vector<16x128xf32>
    %59 = arith.mulf %58, %58 : vector<16x128xf32>
    %c0_35 = arith.constant 0 : index
    %c0_36 = arith.constant 0 : index
    %60 = vector.load %arg14[%c0_35, %c0_36] : memref<128x128xf32, #tpu.memory_space<vmem>>, vector<128x128xf32>
    %cst_37 = arith.constant dense<0.000000e+00> : vector<16x128xf32>
    %61 = tpu.matmul %59, %60, %cst_37 {dimension_numbers = #tpu.dot_dimension_numbers<[1], [0], [0], [1], [0, 0, 1, 1], [], []>} : vector<16x128xf32>, vector<128x128xf32>, vector<16x128xf32> -> vector<16x128xf32>
    %cst_38 = arith.constant 9.99999974E-6 : f32
    %62 = vector.broadcast %cst_38 : f32 to vector<16x128xf32>
    %63 = arith.addf %61, %62 : vector<16x128xf32>
    %64 = math.rsqrt %63 : vector<16x128xf32>
    %65 = arith.mulf %58, %64 : vector<16x128xf32>
    %c0_39 = arith.constant 0 : index
    %c0_40 = arith.constant 0 : index
    %c0_41 = arith.constant 0 : index
    %66 = vector.load %arg10[%c0_39, %c0_40, %c0_41] : memref<1x1x128xf32, #tpu.memory_space<vmem>>, vector<1x1x128xf32>
    %67 = vector.shape_cast %66 : vector<1x1x128xf32> to vector<1x128xf32>
    %68 = vector.broadcast %67 : vector<1x128xf32> to vector<16x128xf32>
    %69 = arith.mulf %65, %68 : vector<16x128xf32>
    %c0_42 = arith.constant 0 : index
    %c0_43 = arith.constant 0 : index
    %c0_44 = arith.constant 0 : index
    %70 = vector.load %arg11[%c0_42, %c0_43, %c0_44] : memref<1x1x128xf32, #tpu.memory_space<vmem>>, vector<1x1x128xf32>
    %71 = vector.shape_cast %70 : vector<1x1x128xf32> to vector<1x128xf32>
    %72 = vector.broadcast %71 : vector<1x128xf32> to vector<16x128xf32>
    %73 = arith.addf %69, %72 : vector<16x128xf32>
    %cst_45 = arith.constant 0.000000e+00 : f32
    %74 = vector.broadcast %cst_45 : f32 to vector<16x128xf32>
    %75 = arith.maximumf %73, %74 : vector<16x128xf32>
    %76 = arith.addf %6, %75 : vector<16x128xf32>
    %c0_46 = arith.constant 0 : index
    %c0_47 = arith.constant 0 : index
    %c0_48 = arith.constant 0 : index
    %77 = vector.load %arg17[%c0_46, %c0_47, %c0_48] : memref<1x16x128xf32, #tpu.memory_space<vmem>>, vector<1x16x128xf32>
    %78 = vector.shape_cast %77 : vector<1x16x128xf32> to vector<16x128xf32>
    %79 = vector.shape_cast %76 : vector<16x128xf32> to vector<1x16x128xf32>
    tpu.vector_store %arg17[%c0_46, %c0_47, %c0_48], %79 {strides = array<i32>} : memref<1x16x128xf32, #tpu.memory_space<vmem>>, vector<1x16x128xf32>,
    %80 = arith.negf %76 : vector<16x128xf32>
    %81 = math.exp %80 : vector<16x128xf32>
    %cst_49 = arith.constant 1.000000e+00 : f32
    %82 = vector.broadcast %cst_49 : f32 to vector<16x128xf32>
    %83 = arith.addf %82, %81 : vector<16x128xf32>
    %84 = arith.divf %82, %83 : vector<16x128xf32>
    %85 = math.exp %84 : vector<16x128xf32>
    %86 = vector.shape_cast %85 : vector<16x128xf32> to vector<8x2x128xf32>
    %cst_50 = arith.constant dense<0.000000e+00> : vector<8x128xf32>
    %87 = vector.multi_reduction <add>, %86, %cst_50 [1] : vector<8x2x128xf32> to vector<8x128xf32>
    %88 = vector.shape_cast %40 : vector<2x128xf32> to vector<1x2x128xf32>
    %89 = vector.broadcast %88 : vector<1x2x128xf32> to vector<8x2x128xf32>
    %90 = arith.mulf %86, %89 : vector<8x2x128xf32>
    %cst_51 = arith.constant dense<0.000000e+00> : vector<8x128xf32>
    %91 = vector.multi_reduction <add>, %90, %cst_51 [1] : vector<8x2x128xf32> to vector<8x128xf32>
    %c32_i32 = arith.constant 32 : i32
    %92 = tpu.dynamic_rotate %87 by %c32_i32 dim 1 : vector<8x128xf32>, i32 -> vector<8x128xf32>
    %93 = arith.addf %87, %92 : vector<8x128xf32>
    %c64_i32 = arith.constant 64 : i32
    %94 = tpu.dynamic_rotate %93 by %c64_i32 dim 1 : vector<8x128xf32>, i32 -> vector<8x128xf32>
    %95 = arith.addf %93, %94 : vector<8x128xf32>
    %c32_i32_52 = arith.constant 32 : i32
    %96 = tpu.dynamic_rotate %91 by %c32_i32_52 dim 1 : vector<8x128xf32>, i32 -> vector<8x128xf32>
    %97 = arith.addf %91, %96 : vector<8x128xf32>
    %c64_i32_53 = arith.constant 64 : i32
    %98 = tpu.dynamic_rotate %97 by %c64_i32_53 dim 1 : vector<8x128xf32>, i32 -> vector<8x128xf32>
    %99 = arith.addf %97, %98 : vector<8x128xf32>
    %100 = tpu.reciprocal %95 : vector<8x128xf32> -> vector<8x128xf32>
    %101 = arith.mulf %99, %100 : vector<8x128xf32>
    %102 = vector.extract_strided_slice %101 {offsets = [0, 0], sizes = [8, 32], strides = [1, 1]} : vector<8x128xf32> to vector<8x32xf32>
    %cst_54 = arith.constant 1.250000e-01 : f32
    %103 = vector.broadcast %cst_54 : f32 to vector<8x32xf32>
    %104 = arith.mulf %102, %103 : vector<8x32xf32>
    %105 = arith.addf %15, %104 : vector<8x32xf32>
    %cst_55 = arith.constant dense<0.000000e+00> : vector<8xf32>
    %106 = vector.multi_reduction <add>, %105, %cst_55 [1] : vector<8x32xf32> to vector<8xf32>
    %107 = vector.shape_cast %106 : vector<8xf32> to vector<8x1xf32>
    %cst_56 = arith.constant 3.200000e+01 : f32
    %108 = vector.broadcast %cst_56 : f32 to vector<8x1xf32>
    %109 = arith.divf %107, %108 : vector<8x1xf32>
    %110 = vector.broadcast %109 : vector<8x1xf32> to vector<8x32xf32>
    %111 = arith.subf %105, %110 : vector<8x32xf32>
    %112 = arith.mulf %111, %111 : vector<8x32xf32>
    %cst_57 = arith.constant dense<0.000000e+00> : vector<8xf32>
    %113 = vector.multi_reduction <add>, %112, %cst_57 [1] : vector<8x32xf32> to vector<8xf32>
    %114 = vector.shape_cast %113 : vector<8xf32> to vector<8x1xf32>
    %cst_58 = arith.constant 3.200000e+01 : f32
    %115 = vector.broadcast %cst_58 : f32 to vector<8x1xf32>
    %116 = arith.divf %114, %115 : vector<8x1xf32>
    %117 = vector.broadcast %109 : vector<8x1xf32> to vector<8x32xf32>
    %118 = arith.subf %105, %117 : vector<8x32xf32>
    %cst_59 = arith.constant 9.99999974E-6 : f32
    %119 = vector.broadcast %cst_59 : f32 to vector<8x1xf32>
    %120 = arith.addf %116, %119 : vector<8x1xf32>
    %121 = math.rsqrt %120 : vector<8x1xf32>
    %122 = vector.broadcast %121 : vector<8x1xf32> to vector<8x32xf32>
    %123 = arith.mulf %118, %122 : vector<8x32xf32>
    %c0_60 = arith.constant 0 : index
    %c0_61 = arith.constant 0 : index
    %c0_62 = arith.constant 0 : index
    %124 = vector.load %arg12[%c0_60, %c0_61, %c0_62] : memref<1x1x32xf32, #tpu.memory_space<vmem>>, vector<1x1x32xf32>
    %125 = vector.shape_cast %124 : vector<1x1x32xf32> to vector<1x32xf32>
    %126 = vector.broadcast %125 : vector<1x32xf32> to vector<8x32xf32>
    %127 = arith.mulf %123, %126 : vector<8x32xf32>
    %c0_63 = arith.constant 0 : index
    %c0_64 = arith.constant 0 : index
    %c0_65 = arith.constant 0 : index
    %128 = vector.load %arg13[%c0_63, %c0_64, %c0_65] : memref<1x1x32xf32, #tpu.memory_space<vmem>>, vector<1x1x32xf32>
    %129 = vector.shape_cast %128 : vector<1x1x32xf32> to vector<1x32xf32>
    %130 = vector.broadcast %129 : vector<1x32xf32> to vector<8x32xf32>
    %131 = arith.addf %127, %130 : vector<8x32xf32>
    %cst_66 = arith.constant 0.000000e+00 : f32
    %132 = vector.broadcast %cst_66 : f32 to vector<8x32xf32>
    %133 = arith.maximumf %131, %132 : vector<8x32xf32>
    %134 = arith.addf %4, %133 : vector<8x32xf32>
    %c0_67 = arith.constant 0 : index
    %c0_68 = arith.constant 0 : index
    %c0_69 = arith.constant 0 : index
    %135 = vector.load %arg16[%c0_67, %c0_68, %c0_69] : memref<1x8x32xf32, #tpu.memory_space<vmem>>, vector<1x8x32xf32>
    %136 = vector.shape_cast %135 : vector<1x8x32xf32> to vector<8x32xf32>
    %137 = vector.shape_cast %134 : vector<8x32xf32> to vector<1x8x32xf32>
    tpu.vector_store %arg16[%c0_67, %c0_68, %c0_69], %137 {strides = array<i32>} : memref<1x8x32xf32, #tpu.memory_space<vmem>>, vector<1x8x32xf32>,
    return
  }
  func.func @transform_0(%arg0: i32, %arg1: i32) -> (i32, i32, i32) {
    %c0_i32 = arith.constant 0 : i32
    %c0_i32_0 = arith.constant 0 : i32
    %c0_i32_1 = arith.constant 0 : i32
    return %arg0, %c0_i32, %c0_i32_0 : i32, i32, i32
  }
  func.func @transform_1(%arg0: i32, %arg1: i32) -> (i32, i32, i32) {
    %c0_i32 = arith.constant 0 : i32
    %c0_i32_0 = arith.constant 0 : i32
    %c0_i32_1 = arith.constant 0 : i32
    return %arg0, %c0_i32, %c0_i32_0 : i32, i32, i32
  }
  func.func @transform_2(%arg0: i32, %arg1: i32) -> (i32, i32, i32) {
    %c0_i32 = arith.constant 0 : i32
    %c0_i32_0 = arith.constant 0 : i32
    %c0_i32_1 = arith.constant 0 : i32
    return %arg1, %c0_i32, %c0_i32_0 : i32, i32, i32
  }
  func.func @transform_3(%arg0: i32, %arg1: i32) -> (i32, i32, i32) {
    %c0_i32 = arith.constant 0 : i32
    %c0_i32_0 = arith.constant 0 : i32
    %c0_i32_1 = arith.constant 0 : i32
    return %arg1, %c0_i32, %c0_i32_0 : i32, i32, i32
  }
  func.func @transform_4(%arg0: i32, %arg1: i32) -> (i32, i32, i32) {
    %c0_i32 = arith.constant 0 : i32
    %c0_i32_0 = arith.constant 0 : i32
    %c0_i32_1 = arith.constant 0 : i32
    return %arg1, %c0_i32, %c0_i32_0 : i32, i32, i32
  }
  func.func @transform_5(%arg0: i32, %arg1: i32) -> (i32, i32, i32) {
    %c0_i32 = arith.constant 0 : i32
    %c0_i32_0 = arith.constant 0 : i32
    %c0_i32_1 = arith.constant 0 : i32
    return %arg1, %c0_i32, %c0_i32_0 : i32, i32, i32
  }
  func.func @transform_6(%arg0: i32, %arg1: i32) -> (i32, i32, i32) {
    %c0_i32 = arith.constant 0 : i32
    %c0_i32_0 = arith.constant 0 : i32
    %c0_i32_1 = arith.constant 0 : i32
    return %arg1, %c0_i32, %c0_i32_0 : i32, i32, i32
  }
  func.func @transform_7(%arg0: i32, %arg1: i32) -> (i32, i32, i32) {
    %c0_i32 = arith.constant 0 : i32
    %c0_i32_0 = arith.constant 0 : i32
    %c0_i32_1 = arith.constant 0 : i32
    return %arg1, %c0_i32, %c0_i32_0 : i32, i32, i32
  }
  func.func @transform_8(%arg0: i32, %arg1: i32) -> (i32, i32, i32) {
    %c0_i32 = arith.constant 0 : i32
    %c0_i32_0 = arith.constant 0 : i32
    %c0_i32_1 = arith.constant 0 : i32
    return %arg1, %c0_i32, %c0_i32_0 : i32, i32, i32
  }
  func.func @transform_9(%arg0: i32, %arg1: i32) -> (i32, i32, i32) {
    %c0_i32 = arith.constant 0 : i32
    %c0_i32_0 = arith.constant 0 : i32
    %c0_i32_1 = arith.constant 0 : i32
    return %arg1, %c0_i32, %c0_i32_0 : i32, i32, i32
  }
  func.func @transform_10(%arg0: i32, %arg1: i32) -> (i32, i32, i32) {
    %c0_i32 = arith.constant 0 : i32
    %c0_i32_0 = arith.constant 0 : i32
    %c0_i32_1 = arith.constant 0 : i32
    return %arg1, %c0_i32, %c0_i32_0 : i32, i32, i32
  }
  func.func @transform_11(%arg0: i32, %arg1: i32) -> (i32, i32, i32) {
    %c0_i32 = arith.constant 0 : i32
    %c0_i32_0 = arith.constant 0 : i32
    %c0_i32_1 = arith.constant 0 : i32
    return %arg1, %c0_i32, %c0_i32_0 : i32, i32, i32
  }
  func.func @transform_12(%arg0: i32, %arg1: i32) -> (i32, i32) {
    %c0_i32 = arith.constant 0 : i32
    %c0_i32_0 = arith.constant 0 : i32
    %c0_i32_1 = arith.constant 0 : i32
    return %c0_i32, %c0_i32_0 : i32, i32
  }
  func.func @transform_13(%arg0: i32, %arg1: i32) -> (i32, i32) {
    %c0_i32 = arith.constant 0 : i32
    %c0_i32_0 = arith.constant 0 : i32
    %c0_i32_1 = arith.constant 0 : i32
    return %c0_i32, %c0_i32_0 : i32, i32
  }
  func.func @transform_14(%arg0: i32, %arg1: i32) -> (i32, i32, i32) {
    %c0_i32 = arith.constant 0 : i32
    %c0_i32_0 = arith.constant 0 : i32
    %c0_i32_1 = arith.constant 0 : i32
    return %arg0, %c0_i32, %c0_i32_0 : i32, i32, i32
  }
  func.func @transform_15(%arg0: i32, %arg1: i32) -> (i32, i32, i32) {
    %c0_i32 = arith.constant 0 : i32
    %c0_i32_0 = arith.constant 0 : i32
    %c0_i32_1 = arith.constant 0 : i32
    return %arg0, %c0_i32, %c0_i32_0 : i32, i32, i32
  }
}

</mosaic_0001>

<llo_original>
// kernel: tpu_custom_call.1
$region0: #{tpu_custom_call.1}
  #allocation0 [shape = 'u32[]', space=smem, size = 0x4, offset = 0x4, fixed_abs, tag = 'smem constant byte address 0x4 - core index']
  #allocation1 [shape = 'u32[144,128]{1,0:T(1,128)}', space=vmem, size = 0x12000, scoped, tag = 'internal scratch']
  %s0 = inlined_call_operand.hbm [shape: f32[2,8,32], index: 0, kind: input, shape index: {}]
  %s1 = inlined_call_operand.hbm [shape: f32[2,16,128], index: 1, kind: input, shape index: {}]
  %s2 = inlined_call_operand.hbm [shape: f32[2,32,160], index: 2, kind: input, shape index: {}]
  %s3 = inlined_call_operand.vmem [shape: f32[2,1,160], index: 3, kind: input, shape index: {}]
  %s4 = inlined_call_operand.hbm [shape: f32[2,128,256], index: 4, kind: input, shape index: {}]
  %s5 = inlined_call_operand.vmem [shape: f32[2,1,256], index: 5, kind: input, shape index: {}]
  %s6 = inlined_call_operand.hbm [shape: f32[2,128,128], index: 6, kind: input, shape index: {}]
  %s7 = inlined_call_operand.vmem [shape: f32[2,1,128], index: 7, kind: input, shape index: {}]
  %s8 = inlined_call_operand.vmem [shape: f32[2,1,128], index: 8, kind: input, shape index: {}]
  %s9 = inlined_call_operand.vmem [shape: f32[2,1,128], index: 9, kind: input, shape index: {}]
  %s10 = inlined_call_operand.vmem [shape: f32[2,1,32], index: 10, kind: input, shape index: {}]
  %s11 = inlined_call_operand.vmem [shape: f32[2,1,32], index: 11, kind: input, shape index: {}]
  %s12 = inlined_call_operand.hbm [shape: f32[128,128], index: 12, kind: input, shape index: {}]
  %s13 = inlined_call_operand.vmem [shape: f32[8,8], index: 13, kind: input, shape index: {}]
  %s14 = inlined_call_operand.hbm [shape: f32[2,8,32], index: 14, kind: output, shape index: {0}]
  %s15 = inlined_call_operand.hbm [shape: f32[2,16,128], index: 15, kind: output, shape index: {1}]
  %16 = xla_tuple %s14, %s15
  %s17 = sld [smem:[#allocation0]]
  $region125: #{tpu_custom_call.1} parent=0
    _
  %s19 = ssub.s32 1, %s17
  %s20 = scalar_select 0, %s19, %s17
  $region1: #{tpu_custom_call.1} parent=0
    #allocation2 [shape = 'u8[8192]{0}', space=vmem, size = 0x2000, scoped, tag = 'input window, operand 0']
    #allocation3 [shape = 's32[2]{0}', space=sflag, size = 0x8, scoped, tag = 'scoped memory for tpu_custom_call.1']
    #allocation4 [shape = 's32[2]{0}', space=sflag, size = 0x8, scoped, tag = 'scoped memory for tpu_custom_call.1']
    #allocation5 [shape = 'u8[16384]{0}', space=vmem, size = 0x4000, scoped, tag = 'input window, operand 1']
    #allocation6 [shape = 's32[2]{0}', space=sflag, size = 0x8, scoped, tag = 'scoped memory for tpu_custom_call.1']
    #allocation7 [shape = 'u8[65536]{0}', space=vmem, size = 0x10000, scoped, tag = 'input window, operand 2']
    #allocation8 [shape = 'u8[262144]{0}', space=vmem, size = 0x40000, scoped, tag = 'input window, operand 4']
    #allocation9 [shape = 's32[2]{0}', space=sflag, size = 0x8, scoped, tag = 'scoped memory for tpu_custom_call.1']
    #allocation10 [shape = 'u8[131072]{0}', space=vmem, size = 0x20000, scoped, tag = 'input window, operand 6']
    #allocation11 [shape = 'u8[65536]{0}', space=vmem, size = 0x10000, scoped, tag = 'input window, operand 12, single buffered']
    #allocation12 [shape = 's32[1]{0}', space=sflag, size = 0x4, scoped, tag = 'scoped memory for tpu_custom_call.1']
    #allocation13 [shape = 'u8[8192]{0}', space=vmem, size = 0x2000, scoped, tag = 'output window, operand 0']
    #allocation14 [shape = 'u8[16384]{0}', space=vmem, size = 0x4000, scoped, tag = 'output window, operand 1']
    #allocation15 [shape = 's32[2]{0}', space=sflag, size = 0x8, scoped, tag = 'scoped memory for tpu_custom_call.1']
    %21 = vsyncpa [#allocation3], 0
    %s22 = scalar_lea.sflag [#allocation3], 1
    %23 = vsyncpa %s22, 0
    %24 = vsyncpa [#allocation6], 0
    %s25 = scalar_lea.sflag [#allocation6], 1
    %26 = vsyncpa %s25, 0
    %27 = vsyncpa [#allocation9], 0
    %s28 = scalar_lea.sflag [#allocation9], 1
    %29 = vsyncpa %s28, 0
    %30 = vsyncpa [#allocation12], 0
    %31 = vsyncpa [#allocation4], 0
    %s32 = scalar_lea.sflag [#allocation4], 1
    %33 = vsyncpa %s32, 0
    %34 = vsyncpa [#allocation15], 0
    %s35 = scalar_lea.sflag [#allocation15], 1
    %36 = vsyncpa %s35, 0
    loop: start=0, step=1, limit=6
    $region2: #{tpu_custom_call.1} parent=1 // loop_pre_header
      _
    $region3: #{tpu_custom_call.1} parent=1 // loop_header
      %s38 = sphi 0, %s42
      %p39 = scmp.ge.s32.totalorder %s38, 6
      %s45 = sphi 0, %s57
      %s46 = sphi 0, %s53
      %s47 = sphi 0, %s45
      %s48 = sphi 0, %s46
      %s49 = sphi 0, %s47
      %s50 = sphi 0, %s48
      %s60 = sphi 0, %s62
      %s63 = sphi 0, %s60
      %s64 = sphi 0, %s63
      %s80 = sphi 0, %s64
      %s86 = sphi 0, %s88
      %s89 = sphi 0, %s86
      %s90 = sphi 0, %s89
      %s106 = sphi 0, %s90
      %s112 = sphi 0, %s114
      %s115 = sphi 0, %s112
      %s116 = sphi 0, %s115
      %s132 = sphi 0, %s116
      %s138 = sphi 0, %s140
      %s141 = sphi 0, %s138
      %s142 = sphi 0, %s141
      %s158 = sphi 0, %s142
      %s164 = sphi 0, %s166
      %s167 = sphi 0, %s164
      %s168 = sphi 0, %s167
      %s184 = sphi 0, %s168
      %s190 = sphi 0, %s192
      %s193 = sphi 0, %s190
      %s194 = sphi 0, %s193
      %s210 = sphi 0, %s194
      %s216 = sphi 0, %s218
      %s219 = sphi 0, %s216
      %s220 = sphi 0, %s219
      %s236 = sphi 0, %s220
      %s242 = sphi 0, %s244
      %s245 = sphi 0, %s242
      %s246 = sphi 0, %s245
      %s262 = sphi 0, %s246
      %s268 = sphi 0, %s270
      %s271 = sphi 0, %s268
      %s272 = sphi 0, %s271
      %s288 = sphi 0, %s272
      %s294 = sphi 0, %s296
      %s297 = sphi 0, %s294
      %s298 = sphi 0, %s297
      %s314 = sphi 0, %s298
      %s320 = sphi 0, %s322
      %s323 = sphi 0, %s320
      %s324 = sphi 0, %s323
      %s340 = sphi 0, %s324
      %s346 = sphi 0, %s348
      %s349 = sphi 0, %s346
      %s350 = sphi 0, %s349
      %s366 = sphi 0, %s350
      %s370 = sphi 0, %s370
      %s372 = sphi 0, %s370
      %s373 = sphi 0, %s372
      %s387 = sphi 0, %s373
      %s391 = sphi 0, %s391
      %s393 = sphi 0, %s391
      %s394 = sphi 0, %s393
      %s408 = sphi 0, %s394
      %s414 = sphi 0, %s416
      %s417 = sphi 0, %s414
      %s418 = sphi 0, %s417
      %s434 = sphi 0, %s418
      %s440 = sphi 0, %s442
      %s443 = sphi 0, %s440
      %s444 = sphi 0, %s443
      %s460 = sphi 0, %s444
    $region4: #{tpu_custom_call.1} parent=1 // loop_header_branch
      %41 = sbr.rel (%p39) target = $region8
    $region5: #{tpu_custom_call.1} parent=1 // loop_body
      %s43 = ssub.s32 %s38, 1
      %s44 = ssub.s32 %s38, 2
      %s51 = sadd.s32 1, %s46
      %p52 = scmp.ge.s32.totalorder %s51, 2
      %s53 = scalar_select %p52, 0, %s51
      %s54 = sadd.s32 1, %s45
      %s55 = scalar_select %p52, %s54, %s45
      %p56 = scmp.ge.s32.totalorder %s55, 2
      %s57 = scalar_select %p56, 0, %s55
      %s58 = ssub.s32 %s45, %s57
      %p59 = scmp.eq.s32.totalorder %s58, 0
      %s61 = sadd.s32 %s60, 1
      %s62 = scalar_select %p59, %s60, %s61
      %p65 = pneg %p59
      %p66 = scmp.eq.s32.totalorder %s38, 3
      %p67 = por %p65, %p66
      %p68 = scmp.ne.s32.totalorder %s60, %s63
      %p69 = scmp.eq.s32.totalorder %s38, 0
      %p70 = por %p68, %p69
      %p71 = scmp.ne.s32.totalorder %s60, %s63
      %p72 = scmp.eq.s32.totalorder %s43, 3
      %p73 = por %p71, %p72
      %p74 = scmp.ne.s32.totalorder %s63, %s64
      %p75 = scmp.eq.s32.totalorder %s43, 0
      %p76 = por %p74, %p75
      %p77 = scmp.ne.s32.totalorder %s63, %s64
      %p78 = scmp.eq.s32.totalorder %s44, 3
      %p79 = por %p77, %p78
      %p81 = scmp.ne.s32.totalorder %s64, %s80
      %p82 = scmp.eq.s32.totalorder %s44, 0
      %p83 = por %p81, %p82
      %s84 = ssub.s32 %s45, %s57
      %p85 = scmp.eq.s32.totalorder %s84, 0
      %s87 = sadd.s32 %s86, 1
      %s88 = scalar_select %p85, %s86, %s87
      %p91 = pneg %p85
      %p92 = scmp.eq.s32.totalorder %s38, 3
      %p93 = por %p91, %p92
      %p94 = scmp.ne.s32.totalorder %s86, %s89
      %p95 = scmp.eq.s32.totalorder %s38, 0
      %p96 = por %p94, %p95
      %p97 = scmp.ne.s32.totalorder %s86, %s89
      %p98 = scmp.eq.s32.totalorder %s43, 3
      %p99 = por %p97, %p98
      %p100 = scmp.ne.s32.totalorder %s89, %s90
      %p101 = scmp.eq.s32.totalorder %s43, 0
      %p102 = por %p100, %p101
      %p103 = scmp.ne.s32.totalorder %s89, %s90
      %p104 = scmp.eq.s32.totalorder %s44, 3
      %p105 = por %p103, %p104
      %p107 = scmp.ne.s32.totalorder %s90, %s106
      %p108 = scmp.eq.s32.totalorder %s44, 0
      %p109 = por %p107, %p108
      %s110 = ssub.s32 %s46, %s53
      %p111 = scmp.eq.s32.totalorder %s110, 0
      %s113 = sadd.s32 %s112, 1
      %s114 = scalar_select %p111, %s112, %s113
      %p117 = pneg %p111
      %p118 = scmp.eq.s32.totalorder %s38, 3
      %p119 = por %p117, %p118
      %p120 = scmp.ne.s32.totalorder %s112, %s115
      %p121 = scmp.eq.s32.totalorder %s38, 0
      %p122 = por %p120, %p121
      %p123 = scmp.ne.s32.totalorder %s112, %s115
      %p124 = scmp.eq.s32.totalorder %s43, 3
      %p125 = por %p123, %p124
      %p126 = scmp.ne.s32.totalorder %s115, %s116
      %p127 = scmp.eq.s32.totalorder %s43, 0
      %p128 = por %p126, %p127
      %p129 = scmp.ne.s32.totalorder %s115, %s116
      %p130 = scmp.eq.s32.totalorder %s44, 3
      %p131 = por %p129, %p130
      %p133 = scmp.ne.s32.totalorder %s116, %s132
      %p134 = scmp.eq.s32.totalorder %s44, 0
      %p135 = por %p133, %p134
      %s136 = ssub.s32 %s46, %s53
      %p137 = scmp.eq.s32.totalorder %s136, 0
      %s139 = sadd.s32 %s138, 1
      %s140 = scalar_select %p137, %s138, %s139
      %p143 = pneg %p137
      %p144 = scmp.eq.s32.totalorder %s38, 3
      %p145 = por %p143, %p144
      %p146 = scmp.ne.s32.totalorder %s138, %s141
      %p147 = scmp.eq.s32.totalorder %s38, 0
      %p148 = por %p146, %p147
      %p149 = scmp.ne.s32.totalorder %s138, %s141
      %p150 = scmp.eq.s32.totalorder %s43, 3
      %p151 = por %p149, %p150
      %p152 = scmp.ne.s32.totalorder %s141, %s142
      %p153 = scmp.eq.s32.totalorder %s43, 0
      %p154 = por %p152, %p153
      %p155 = scmp.ne.s32.totalorder %s141, %s142
      %p156 = scmp.eq.s32.totalorder %s44, 3
      %p157 = por %p155, %p156
      %p159 = scmp.ne.s32.totalorder %s142, %s158
      %p160 = scmp.eq.s32.totalorder %s44, 0
      %p161 = por %p159, %p160
      %s162 = ssub.s32 %s46, %s53
      %p163 = scmp.eq.s32.totalorder %s162, 0
      %s165 = sadd.s32 %s164, 1
      %s166 = scalar_select %p163, %s164, %s165
      %p169 = pneg %p163
      %p170 = scmp.eq.s32.totalorder %s38, 3
      %p171 = por %p169, %p170
      %p172 = scmp.ne.s32.totalorder %s164, %s167
      %p173 = scmp.eq.s32.totalorder %s38, 0
      %p174 = por %p172, %p173
      %p175 = scmp.ne.s32.totalorder %s164, %s167
      %p176 = scmp.eq.s32.totalorder %s43, 3
      %p177 = por %p175, %p176
      %p178 = scmp.ne.s32.totalorder %s167, %s168
      %p179 = scmp.eq.s32.totalorder %s43, 0
      %p180 = por %p178, %p179
      %p181 = scmp.ne.s32.totalorder %s167, %s168
      %p182 = scmp.eq.s32.totalorder %s44, 3
      %p183 = por %p181, %p182
      %p185 = scmp.ne.s32.totalorder %s168, %s184
      %p186 = scmp.eq.s32.totalorder %s44, 0
      %p187 = por %p185, %p186
      %s188 = ssub.s32 %s46, %s53
      %p189 = scmp.eq.s32.totalorder %s188, 0
      %s191 = sadd.s32 %s190, 1
      %s192 = scalar_select %p189, %s190, %s191
      %p195 = pneg %p189
      %p196 = scmp.eq.s32.totalorder %s38, 3
      %p197 = por %p195, %p196
      %p198 = scmp.ne.s32.totalorder %s190, %s193
      %p199 = scmp.eq.s32.totalorder %s38, 0
      %p200 = por %p198, %p199
      %p201 = scmp.ne.s32.totalorder %s190, %s193
      %p202 = scmp.eq.s32.totalorder %s43, 3
      %p203 = por %p201, %p202
      %p204 = scmp.ne.s32.totalorder %s193, %s194
      %p205 = scmp.eq.s32.totalorder %s43, 0
      %p206 = por %p204, %p205
      %p207 = scmp.ne.s32.totalorder %s193, %s194
      %p208 = scmp.eq.s32.totalorder %s44, 3
      %p209 = por %p207, %p208
      %p211 = scmp.ne.s32.totalorder %s194, %s210
      %p212 = scmp.eq.s32.totalorder %s44, 0
      %p213 = por %p211, %p212
      %s214 = ssub.s32 %s46, %s53
      %p215 = scmp.eq.s32.totalorder %s214, 0
      %s217 = sadd.s32 %s216, 1
      %s218 = scalar_select %p215, %s216, %s217
      %p221 = pneg %p215
      %p222 = scmp.eq.s32.totalorder %s38, 3
      %p223 = por %p221, %p222
      %p224 = scmp.ne.s32.totalorder %s216, %s219
      %p225 = scmp.eq.s32.totalorder %s38, 0
      %p226 = por %p224, %p225
      %p227 = scmp.ne.s32.totalorder %s216, %s219
      %p228 = scmp.eq.s32.totalorder %s43, 3
      %p229 = por %p227, %p228
      %p230 = scmp.ne.s32.totalorder %s219, %s220
      %p231 = scmp.eq.s32.totalorder %s43, 0
      %p232 = por %p230, %p231
      %p233 = scmp.ne.s32.totalorder %s219, %s220
      %p234 = scmp.eq.s32.totalorder %s44, 3
      %p235 = por %p233, %p234
      %p237 = scmp.ne.s32.totalorder %s220, %s236
      %p238 = scmp.eq.s32.totalorder %s44, 0
      %p239 = por %p237, %p238
      %s240 = ssub.s32 %s46, %s53
      %p241 = scmp.eq.s32.totalorder %s240, 0
      %s243 = sadd.s32 %s242, 1
      %s244 = scalar_select %p241, %s242, %s243
      %p247 = pneg %p241
      %p248 = scmp.eq.s32.totalorder %s38, 3
      %p249 = por %p247, %p248
      %p250 = scmp.ne.s32.totalorder %s242, %s245
      %p251 = scmp.eq.s32.totalorder %s38, 0
      %p252 = por %p250, %p251
      %p253 = scmp.ne.s32.totalorder %s242, %s245
      %p254 = scmp.eq.s32.totalorder %s43, 3
      %p255 = por %p253, %p254
      %p256 = scmp.ne.s32.totalorder %s245, %s246
      %p257 = scmp.eq.s32.totalorder %s43, 0
      %p258 = por %p256, %p257
      %p259 = scmp.ne.s32.totalorder %s245, %s246
      %p260 = scmp.eq.s32.totalorder %s44, 3
      %p261 = por %p259, %p260
      %p263 = scmp.ne.s32.totalorder %s246, %s262
      %p264 = scmp.eq.s32.totalorder %s44, 0
      %p265 = por %p263, %p264
      %s266 = ssub.s32 %s46, %s53
      %p267 = scmp.eq.s32.totalorder %s266, 0
      %s269 = sadd.s32 %s268, 1
      %s270 = scalar_select %p267, %s268, %s269
      %p273 = pneg %p267
      %p274 = scmp.eq.s32.totalorder %s38, 3
      %p275 = por %p273, %p274
      %p276 = scmp.ne.s32.totalorder %s268, %s271
      %p277 = scmp.eq.s32.totalorder %s38, 0
      %p278 = por %p276, %p277
      %p279 = scmp.ne.s32.totalorder %s268, %s271
      %p280 = scmp.eq.s32.totalorder %s43, 3
      %p281 = por %p279, %p280
      %p282 = scmp.ne.s32.totalorder %s271, %s272
      %p283 = scmp.eq.s32.totalorder %s43, 0
      %p284 = por %p282, %p283
      %p285 = scmp.ne.s32.totalorder %s271, %s272
      %p286 = scmp.eq.s32.totalorder %s44, 3
      %p287 = por %p285, %p286
      %p289 = scmp.ne.s32.totalorder %s272, %s288
      %p290 = scmp.eq.s32.totalorder %s44, 0
      %p291 = por %p289, %p290
      %s292 = ssub.s32 %s46, %s53
      %p293 = scmp.eq.s32.totalorder %s292, 0
      %s295 = sadd.s32 %s294, 1
      %s296 = scalar_select %p293, %s294, %s295
      %p299 = pneg %p293
      %p300 = scmp.eq.s32.totalorder %s38, 3
      %p301 = por %p299, %p300
      %p302 = scmp.ne.s32.totalorder %s294, %s297
      %p303 = scmp.eq.s32.totalorder %s38, 0
      %p304 = por %p302, %p303
      %p305 = scmp.ne.s32.totalorder %s294, %s297
      %p306 = scmp.eq.s32.totalorder %s43, 3
      %p307 = por %p305, %p306
      %p308 = scmp.ne.s32.totalorder %s297, %s298
      %p309 = scmp.eq.s32.totalorder %s43, 0
      %p310 = por %p308, %p309
      %p311 = scmp.ne.s32.totalorder %s297, %s298
      %p312 = scmp.eq.s32.totalorder %s44, 3
      %p313 = por %p311, %p312
      %p315 = scmp.ne.s32.totalorder %s298, %s314
      %p316 = scmp.eq.s32.totalorder %s44, 0
      %p317 = por %p315, %p316
      %s318 = ssub.s32 %s46, %s53
      %p319 = scmp.eq.s32.totalorder %s318, 0
      %s321 = sadd.s32 %s320, 1
      %s322 = scalar_select %p319, %s320, %s321
      %p325 = pneg %p319
      %p326 = scmp.eq.s32.totalorder %s38, 3
      %p327 = por %p325, %p326
      %p328 = scmp.ne.s32.totalorder %s320, %s323
      %p329 = scmp.eq.s32.totalorder %s38, 0
      %p330 = por %p328, %p329
      %p331 = scmp.ne.s32.totalorder %s320, %s323
      %p332 = scmp.eq.s32.totalorder %s43, 3
      %p333 = por %p331, %p332
      %p334 = scmp.ne.s32.totalorder %s323, %s324
      %p335 = scmp.eq.s32.totalorder %s43, 0
      %p336 = por %p334, %p335
      %p337 = scmp.ne.s32.totalorder %s323, %s324
      %p338 = scmp.eq.s32.totalorder %s44, 3
      %p339 = por %p337, %p338
      %p341 = scmp.ne.s32.totalorder %s324, %s340
      %p342 = scmp.eq.s32.totalorder %s44, 0
      %p343 = por %p341, %p342
      %s344 = ssub.s32 %s46, %s53
      %p345 = scmp.eq.s32.totalorder %s344, 0
      %s347 = sadd.s32 %s346, 1
      %s348 = scalar_select %p345, %s346, %s347
      %p351 = pneg %p345
      %p352 = scmp.eq.s32.totalorder %s38, 3
      %p353 = por %p351, %p352
      %p354 = scmp.ne.s32.totalorder %s346, %s349
      %p355 = scmp.eq.s32.totalorder %s38, 0
      %p356 = por %p354, %p355
      %p357 = scmp.ne.s32.totalorder %s346, %s349
      %p358 = scmp.eq.s32.totalorder %s43, 3
      %p359 = por %p357, %p358
      %p360 = scmp.ne.s32.totalorder %s349, %s350
      %p361 = scmp.eq.s32.totalorder %s43, 0
      %p362 = por %p360, %p361
      %p363 = scmp.ne.s32.totalorder %s349, %s350
      %p364 = scmp.eq.s32.totalorder %s44, 3
      %p365 = por %p363, %p364
      %p367 = scmp.ne.s32.totalorder %s350, %s366
      %p368 = scmp.eq.s32.totalorder %s44, 0
      %p369 = por %p367, %p368
      %s371 = sadd.s32 %s370, 1
      %p374 = scmp.eq.s32.totalorder %s38, 3
      %p375 = scmp.ne.s32.totalorder %s370, %s372
      %p376 = scmp.eq.s32.totalorder %s38, 0
      %p377 = por %p375, %p376
      %p378 = scmp.ne.s32.totalorder %s370, %s372
      %p379 = scmp.eq.s32.totalorder %s43, 3
      %p380 = por %p378, %p379
      %p381 = scmp.ne.s32.totalorder %s372, %s373
      %p382 = scmp.eq.s32.totalorder %s43, 0
      %p383 = por %p381, %p382
      %p384 = scmp.ne.s32.totalorder %s372, %s373
      %p385 = scmp.eq.s32.totalorder %s44, 3
      %p386 = por %p384, %p385
      %p388 = scmp.ne.s32.totalorder %s373, %s387
      %p389 = scmp.eq.s32.totalorder %s44, 0
      %p390 = por %p388, %p389
      %s392 = sadd.s32 %s391, 1
      %p395 = scmp.eq.s32.totalorder %s38, 3
      %p396 = scmp.ne.s32.totalorder %s391, %s393
      %p397 = scmp.eq.s32.totalorder %s38, 0
      %p398 = por %p396, %p397
      %p399 = scmp.ne.s32.totalorder %s391, %s393
      %p400 = scmp.eq.s32.totalorder %s43, 3
      %p401 = por %p399, %p400
      %p402 = scmp.ne.s32.totalorder %s393, %s394
      %p403 = scmp.eq.s32.totalorder %s43, 0
      %p404 = por %p402, %p403
      %p405 = scmp.ne.s32.totalorder %s393, %s394
      %p406 = scmp.eq.s32.totalorder %s44, 3
      %p407 = por %p405, %p406
      %p409 = scmp.ne.s32.totalorder %s394, %s408
      %p410 = scmp.eq.s32.totalorder %s44, 0
      %p411 = por %p409, %p410
      %s412 = ssub.s32 %s45, %s57
      %p413 = scmp.eq.s32.totalorder %s412, 0
      %s415 = sadd.s32 %s414, 1
      %s416 = scalar_select %p413, %s414, %s415
      %p419 = pneg %p413
      %p420 = scmp.eq.s32.totalorder %s38, 3
      %p421 = por %p419, %p420
      %p422 = scmp.ne.s32.totalorder %s414, %s417
      %p423 = scmp.eq.s32.totalorder %s38, 0
      %p424 = por %p422, %p423
      %p425 = scmp.ne.s32.totalorder %s414, %s417
      %p426 = scmp.eq.s32.totalorder %s43, 3
      %p427 = por %p425, %p426
      %p428 = scmp.ne.s32.totalorder %s417, %s418
      %p429 = scmp.eq.s32.totalorder %s43, 0
      %p430 = por %p428, %p429
      %p431 = scmp.ne.s32.totalorder %s417, %s418
      %p432 = scmp.eq.s32.totalorder %s44, 3
      %p433 = por %p431, %p432
      %p435 = scmp.ne.s32.totalorder %s418, %s434
      %p436 = scmp.eq.s32.totalorder %s44, 0
      %p437 = por %p435, %p436
      %s438 = ssub.s32 %s45, %s57
      %p439 = scmp.eq.s32.totalorder %s438, 0
      %s441 = sadd.s32 %s440, 1
      %s442 = scalar_select %p439, %s440, %s441
      %p445 = pneg %p439
      %p446 = scmp.eq.s32.totalorder %s38, 3
      %p447 = por %p445, %p446
      %p448 = scmp.ne.s32.totalorder %s440, %s443
      %p449 = scmp.eq.s32.totalorder %s38, 0
      %p450 = por %p448, %p449
      %p451 = scmp.ne.s32.totalorder %s440, %s443
      %p452 = scmp.eq.s32.totalorder %s43, 3
      %p453 = por %p451, %p452
      %p454 = scmp.ne.s32.totalorder %s443, %s444
      %p455 = scmp.eq.s32.totalorder %s43, 0
      %p456 = por %p454, %p455
      %p457 = scmp.ne.s32.totalorder %s443, %s444
      %p458 = scmp.eq.s32.totalorder %s44, 3
      %p459 = por %p457, %p458
      %p461 = scmp.ne.s32.totalorder %s444, %s460
      %p462 = scmp.eq.s32.totalorder %s44, 0
      %p463 = por %p461, %p462
      %p464 = scmp.le.s32.totalorder 1, %s38
      %p465 = scmp.lt.s32.totalorder %s38, 5
      %p466 = pnand %p464, %p465
      %p467 = pneg %p466
      // Predicated region
      $region9: #{tpu_custom_call.1} parent=5 // pred_check
        _
      $region10: #{tpu_custom_call.1} parent=5 // pred_check_branch
        %469 = sbr.rel (%p466) target = $region12
      $region11: #{tpu_custom_call.1} parent=5 // pred_region
        %s470 = ssub.s32 %s38, 1
        // Predicated region
        $region13: #{tpu_custom_call.1} parent=11 // pred_check
          %p471 = pneg %p383
        $region14: #{tpu_custom_call.1} parent=11 // pred_check_branch
          %473 = sbr.rel (%p471) target = $region16
        $region15: #{tpu_custom_call.1} parent=11 // pred_region
          %s475 = ssub.s32 2048, 2048
          %476 = vsyncadd [#allocation12], %s475
          %s477 = sshll.u32 [#allocation11], 4
          %s478 = int_to_ptr.vmem [resolvable:$true] %s477
          %483 = dma.hbm_to_vmem [thread:$0]  %s12, 2048, %s478, [#allocation12], 128, 128, 8
        $region16: #{tpu_custom_call.1} parent=11 // pred_fallthru
          _
        // Predicated region
        $region17: #{tpu_custom_call.1} parent=11 // pred_check
          %p484 = pneg %p404
        $region18: #{tpu_custom_call.1} parent=11 // pred_check_branch
          %486 = sbr.rel (%p484) target = $region20
        $region19: #{tpu_custom_call.1} parent=11 // pred_region
          _
        $region20: #{tpu_custom_call.1} parent=11 // pred_fallthru
          _
      $region12: #{tpu_custom_call.1} parent=5 // pred_fallthru
        _
      %p487 = scmp.lt.s32.totalorder %s38, 4
      // Predicated region
      $region21: #{tpu_custom_call.1} parent=5 // pred_check
        %p488 = pneg %p487
      $region22: #{tpu_custom_call.1} parent=5 // pred_check_branch
        %490 = sbr.rel (%p488) target = $region24
      $region23: #{tpu_custom_call.1} parent=5 // pred_region
        // Predicated region
        $region25: #{tpu_custom_call.1} parent=23 // pred_check
          %p491 = pneg %p70
        $region26: #{tpu_custom_call.1} parent=23 // pred_check_branch
          %493 = sbr.rel (%p491) target = $region28
        $region27: #{tpu_custom_call.1} parent=23 // pred_region
          %s494 = sand.u32 %s60, 1
          %s495 = scalar_lea.sflag [#allocation3], %s494
          %s496 = sand.u32 %s60, 1
          %s497 = smul.addr %s496, 8
          %s498 = scalar_lea.vmem [#allocation2], %s497
          %s500 = ssub.s32 128, 128
          %501 = vsyncadd %s495, %s500
          %s502 = smul.addr %s45, 128
          %s503 = scalar_lea.hbm %s0, %s502
          %s505 = sshll.u32 %s498, 4
          %s506 = int_to_ptr.vmem [resolvable:$true] %s505
          %508 = dma.hbm_to_vmem [thread:$0]  %s503, 128, %s506, %s495
        $region28: #{tpu_custom_call.1} parent=23 // pred_fallthru
          _
        // Predicated region
        $region29: #{tpu_custom_call.1} parent=23 // pred_check
          %p509 = pneg %p96
        $region30: #{tpu_custom_call.1} parent=23 // pred_check_branch
          %511 = sbr.rel (%p509) target = $region32
        $region31: #{tpu_custom_call.1} parent=23 // pred_region
          %s512 = sand.u32 %s38, 1
          %s513 = scalar_lea.sflag [#allocation6], %s512
          %s514 = sand.u32 %s86, 1
          %s515 = smul.addr %s514, 16
          %s516 = scalar_lea.vmem [#allocation5], %s515
          %s518 = ssub.s32 256, 256
          %519 = vsyncadd %s513, %s518
          %s520 = smul.addr %s45, 2
          %s521 = smul.addr %s520, 128
          %s522 = scalar_lea.hbm %s1, %s521
          %s523 = sshll.u32 %s516, 4
          %s524 = int_to_ptr.vmem [resolvable:$true] %s523
          %529 = dma.hbm_to_vmem [thread:$0]  %s522, 256, %s524, %s513, 128, 128, 8
        $region32: #{tpu_custom_call.1} parent=23 // pred_fallthru
          _
        // Predicated region
        $region33: #{tpu_custom_call.1} parent=23 // pred_check
          %p530 = pneg %p122
        $region34: #{tpu_custom_call.1} parent=23 // pred_check_branch
          %532 = sbr.rel (%p530) target = $region36
        $region35: #{tpu_custom_call.1} parent=23 // pred_region
          %s533 = sand.u32 %s38, 1
          %s534 = scalar_lea.sflag [#allocation6], %s533
          %s535 = sand.u32 %s112, 1
          %s536 = smul.addr %s535, 64
          %s537 = scalar_lea.vmem [#allocation7], %s536
          %s539 = ssub.s32 1024, 1024
          %540 = vsyncadd %s534, %s539
          %s541 = smul.addr %s46, 8
          %s542 = smul.addr %s541, 128
          %s543 = scalar_lea.hbm %s2, %s542
          %s544 = sshll.u32 %s537, 4
          %s545 = int_to_ptr.vmem [resolvable:$true] %s544
          %550 = dma.hbm_to_vmem [thread:$0]  %s543, 1024, %s545, %s534, 256, 256, 16
        $region36: #{tpu_custom_call.1} parent=23 // pred_fallthru
          _
        // Predicated region
        $region37: #{tpu_custom_call.1} parent=23 // pred_check
          %p551 = pneg %p148
        $region38: #{tpu_custom_call.1} parent=23 // pred_check_branch
          %553 = sbr.rel (%p551) target = $region40
        $region39: #{tpu_custom_call.1} parent=23 // pred_region
          %p554 = scmp.lt.s32.totalorder %s46, 1
          %s555 = scalar_select %p554, %s46, 1
          %s556 = smul.addr %s555, 2
          %s557 = scalar_lea.vmem %s3, %s556
        $region40: #{tpu_custom_call.1} parent=23 // pred_fallthru
          _
        // Predicated region
        $region41: #{tpu_custom_call.1} parent=23 // pred_check
          %p558 = pneg %p174
        $region42: #{tpu_custom_call.1} parent=23 // pred_check_branch
          %560 = sbr.rel (%p558) target = $region44
        $region43: #{tpu_custom_call.1} parent=23 // pred_region
          %s561 = sand.u32 %s38, 1
          %s562 = scalar_lea.sflag [#allocation9], %s561
          %s563 = sand.u32 %s164, 1
          %s564 = smul.addr %s563, 256
          %s565 = scalar_lea.vmem [#allocation8], %s564
          %s567 = ssub.s32 4096, 4096
          %568 = vsyncadd %s562, %s567
          %s569 = smul.addr %s46, 32
          %s570 = smul.addr %s569, 128
          %s571 = scalar_lea.hbm %s4, %s570
          %s572 = sshll.u32 %s565, 4
          %s573 = int_to_ptr.vmem [resolvable:$true] %s572
          %578 = dma.hbm_to_vmem [thread:$0]  %s571, 4096, %s573, %s562, 256, 256, 16
        $region44: #{tpu_custom_call.1} parent=23 // pred_fallthru
          _
        // Predicated region
        $region45: #{tpu_custom_call.1} parent=23 // pred_check
          %p579 = pneg %p200
        $region46: #{tpu_custom_call.1} parent=23 // pred_check_branch
          %581 = sbr.rel (%p579) target = $region48
        $region47: #{tpu_custom_call.1} parent=23 // pred_region
          %p582 = scmp.lt.s32.totalorder %s46, 1
          %s583 = scalar_select %p582, %s46, 1
          %s584 = smul.addr %s583, 2
          %s585 = scalar_lea.vmem %s5, %s584
        $region48: #{tpu_custom_call.1} parent=23 // pred_fallthru
          _
        // Predicated region
        $region49: #{tpu_custom_call.1} parent=23 // pred_check
          %p586 = pneg %p226
        $region50: #{tpu_custom_call.1} parent=23 // pred_check_branch
          %588 = sbr.rel (%p586) target = $region52
        $region51: #{tpu_custom_call.1} parent=23 // pred_region
          %s589 = sand.u32 %s38, 1
          %s590 = scalar_lea.sflag [#allocation9], %s589
          %s591 = sand.u32 %s216, 1
          %s592 = smul.addr %s591, 128
          %s593 = scalar_lea.vmem [#allocation10], %s592
          %s595 = ssub.s32 2048, 2048
          %596 = vsyncadd %s590, %s595
          %s597 = smul.addr %s46, 16
          %s598 = smul.addr %s597, 128
          %s599 = scalar_lea.hbm %s6, %s598
          %s600 = sshll.u32 %s593, 4
          %s601 = int_to_ptr.vmem [resolvable:$true] %s600
          %606 = dma.hbm_to_vmem [thread:$0]  %s599, 2048, %s601, %s590, 128, 128, 8
        $region52: #{tpu_custom_call.1} parent=23 // pred_fallthru
          _
        // Predicated region
        $region53: #{tpu_custom_call.1} parent=23 // pred_check
          %p607 = pneg %p252
        $region54: #{tpu_custom_call.1} parent=23 // pred_check_branch
          %609 = sbr.rel (%p607) target = $region56
        $region55: #{tpu_custom_call.1} parent=23 // pred_region
          %p610 = scmp.lt.s32.totalorder %s46, 1
          %s611 = scalar_select %p610, %s46, 1
          %s612 = scalar_lea.vmem %s7, %s611
        $region56: #{tpu_custom_call.1} parent=23 // pred_fallthru
          _
        // Predicated region
        $region57: #{tpu_custom_call.1} parent=23 // pred_check
          %p613 = pneg %p278
        $region58: #{tpu_custom_call.1} parent=23 // pred_check_branch
          %615 = sbr.rel (%p613) target = $region60
        $region59: #{tpu_custom_call.1} parent=23 // pred_region
          %p616 = scmp.lt.s32.totalorder %s46, 1
          %s617 = scalar_select %p616, %s46, 1
          %s618 = scalar_lea.vmem %s8, %s617
        $region60: #{tpu_custom_call.1} parent=23 // pred_fallthru
          _
        // Predicated region
        $region61: #{tpu_custom_call.1} parent=23 // pred_check
          %p619 = pneg %p304
        $region62: #{tpu_custom_call.1} parent=23 // pred_check_branch
          %621 = sbr.rel (%p619) target = $region64
        $region63: #{tpu_custom_call.1} parent=23 // pred_region
          %p622 = scmp.lt.s32.totalorder %s46, 1
          %s623 = scalar_select %p622, %s46, 1
          %s624 = scalar_lea.vmem %s9, %s623
        $region64: #{tpu_custom_call.1} parent=23 // pred_fallthru
          _
        // Predicated region
        $region65: #{tpu_custom_call.1} parent=23 // pred_check
          %p625 = pneg %p330
        $region66: #{tpu_custom_call.1} parent=23 // pred_check_branch
          %627 = sbr.rel (%p625) target = $region68
        $region67: #{tpu_custom_call.1} parent=23 // pred_region
          %p628 = scmp.lt.s32.totalorder %s46, 1
          %s629 = scalar_select %p628, %s46, 1
          %s630 = scalar_lea.vmem %s10, %s629
        $region68: #{tpu_custom_call.1} parent=23 // pred_fallthru
          _
        // Predicated region
        $region69: #{tpu_custom_call.1} parent=23 // pred_check
          %p631 = pneg %p356
        $region70: #{tpu_custom_call.1} parent=23 // pred_check_branch
          %633 = sbr.rel (%p631) target = $region72
        $region71: #{tpu_custom_call.1} parent=23 // pred_region
          %p634 = scmp.lt.s32.totalorder %s46, 1
          %s635 = scalar_select %p634, %s46, 1
          %s636 = scalar_lea.vmem %s11, %s635
        $region72: #{tpu_custom_call.1} parent=23 // pred_fallthru
          _
      $region24: #{tpu_custom_call.1} parent=5 // pred_fallthru
        _
      %p637 = scmp.le.s32.totalorder 1, %s38
      %p638 = scmp.lt.s32.totalorder %s38, 5
      %p639 = pnand %p637, %p638
      %p640 = pneg %p639
      // Predicated region
      $region73: #{tpu_custom_call.1} parent=5 // pred_check
        _
      $region74: #{tpu_custom_call.1} parent=5 // pred_check_branch
        %642 = sbr.rel (%p639) target = $region76
      $region75: #{tpu_custom_call.1} parent=5 // pred_region
        %s643 = ssub.s32 %s38, 1
        %s644 = sand.u32 %s63, 1
        %s645 = scalar_lea.sflag [#allocation3], %s644
        %s646 = sand.u32 %s63, 1
        %s647 = smul.addr %s646, 8
        %s648 = scalar_lea.vmem [#allocation2], %s647
        // Predicated region
        $region77: #{tpu_custom_call.1} parent=75 // pred_check
          %p649 = pneg %p76
        $region78: #{tpu_custom_call.1} parent=75 // pred_check_branch
          %651 = sbr.rel (%p649) target = $region80
        $region79: #{tpu_custom_call.1} parent=75 // pred_region
          %652 = dma.done %s645, 128
        $region80: #{tpu_custom_call.1} parent=75 // pred_fallthru
          _
        %s653 = sand.u32 %s43, 1
        %s654 = scalar_lea.sflag [#allocation6], %s653
        %s655 = sand.u32 %s89, 1
        %s656 = smul.addr %s655, 16
        %s657 = scalar_lea.vmem [#allocation5], %s656
        // Predicated region
        $region81: #{tpu_custom_call.1} parent=75 // pred_check
          %p658 = pneg %p102
        $region82: #{tpu_custom_call.1} parent=75 // pred_check_branch
          %660 = sbr.rel (%p658) target = $region84
        $region83: #{tpu_custom_call.1} parent=75 // pred_region
          %661 = dma.done %s654, 256
        $region84: #{tpu_custom_call.1} parent=75 // pred_fallthru
          _
        %s662 = sand.u32 %s43, 1
        %s663 = scalar_lea.sflag [#allocation6], %s662
        %s664 = sand.u32 %s115, 1
        %s665 = smul.addr %s664, 64
        %s666 = scalar_lea.vmem [#allocation7], %s665
        // Predicated region
        $region85: #{tpu_custom_call.1} parent=75 // pred_check
          %p667 = pneg %p128
        $region86: #{tpu_custom_call.1} parent=75 // pred_check_branch
          %669 = sbr.rel (%p667) target = $region88
        $region87: #{tpu_custom_call.1} parent=75 // pred_region
          %670 = dma.done %s663, 1024
        $region88: #{tpu_custom_call.1} parent=75 // pred_fallthru
          _
        %s671 = sand.u32 %s43, 1
        %s672 = scalar_lea.sflag [#allocation9], %s671
        %s673 = sand.u32 %s167, 1
        %s674 = smul.addr %s673, 256
        %s675 = scalar_lea.vmem [#allocation8], %s674
        // Predicated region
        $region89: #{tpu_custom_call.1} parent=75 // pred_check
          %p676 = pneg %p180
        $region90: #{tpu_custom_call.1} parent=75 // pred_check_branch
          %678 = sbr.rel (%p676) target = $region92
        $region91: #{tpu_custom_call.1} parent=75 // pred_region
          %679 = dma.done %s672, 4096
        $region92: #{tpu_custom_call.1} parent=75 // pred_fallthru
          _
        %s680 = sand.u32 %s43, 1
        %s681 = scalar_lea.sflag [#allocation9], %s680
        %s682 = sand.u32 %s219, 1
        %s683 = smul.addr %s682, 128
        %s684 = scalar_lea.vmem [#allocation10], %s683
        // Predicated region
        $region93: #{tpu_custom_call.1} parent=75 // pred_check
          %p685 = pneg %p232
        $region94: #{tpu_custom_call.1} parent=75 // pred_check_branch
          %687 = sbr.rel (%p685) target = $region96
        $region95: #{tpu_custom_call.1} parent=75 // pred_region
          %688 = dma.done %s681, 2048
        $region96: #{tpu_custom_call.1} parent=75 // pred_fallthru
          _
        // Predicated region
        $region97: #{tpu_custom_call.1} parent=75 // pred_check
          %p689 = pneg %p383
        $region98: #{tpu_custom_call.1} parent=75 // pred_check_branch
          %691 = sbr.rel (%p689) target = $region100
        $region99: #{tpu_custom_call.1} parent=75 // pred_region
          %692 = dma.done [#allocation12], 2048
        $region100: #{tpu_custom_call.1} parent=75 // pred_fallthru
          _
        %s693 = sand.u32 %s63, 1
        %s694 = scalar_lea.sflag [#allocation3], %s693
        %s695 = sand.u32 %s63, 1
        %s696 = smul.addr %s695, 8
        %s697 = scalar_lea.vmem [#allocation2], %s696
        %p698 = pneg %p76
        %p699 = pneg %p73
        %s700 = sand.u32 %s43, 1
        %s701 = scalar_lea.sflag [#allocation6], %s700
        %s702 = sand.u32 %s89, 1
        %s703 = smul.addr %s702, 16
        %s704 = scalar_lea.vmem [#allocation5], %s703
        %p705 = pneg %p102
        %p706 = pneg %p99
        %s707 = sand.u32 %s43, 1
        %s708 = scalar_lea.sflag [#allocation6], %s707
        %s709 = sand.u32 %s115, 1
        %s710 = smul.addr %s709, 64
        %s711 = scalar_lea.vmem [#allocation7], %s710
        %p712 = pneg %p128
        %p713 = pneg %p125
        %p714 = scmp.lt.s32.totalorder %s48, 1
        %s715 = scalar_select %p714, %s48, 1
        %s716 = smul.addr %s715, 2
        %s717 = scalar_lea.vmem %s3, %s716
        %p718 = pneg %p154
        %p719 = pneg %p151
        %s720 = sand.u32 %s43, 1
        %s721 = scalar_lea.sflag [#allocation9], %s720
        %s722 = sand.u32 %s167, 1
        %s723 = smul.addr %s722, 256
        %s724 = scalar_lea.vmem [#allocation8], %s723
        %p725 = pneg %p180
        %p726 = pneg %p177
        %p727 = scmp.lt.s32.totalorder %s48, 1
        %s728 = scalar_select %p727, %s48, 1
        %s729 = smul.addr %s728, 2
        %s730 = scalar_lea.vmem %s5, %s729
        %p731 = pneg %p206
        %p732 = pneg %p203
        %s733 = sand.u32 %s43, 1
        %s734 = scalar_lea.sflag [#allocation9], %s733
        %s735 = sand.u32 %s219, 1
        %s736 = smul.addr %s735, 128
        %s737 = scalar_lea.vmem [#allocation10], %s736
        %p738 = pneg %p232
        %p739 = pneg %p229
        %p740 = scmp.lt.s32.totalorder %s48, 1
        %s741 = scalar_select %p740, %s48, 1
        %s742 = scalar_lea.vmem %s7, %s741
        %p743 = pneg %p258
        %p744 = pneg %p255
        %p745 = scmp.lt.s32.totalorder %s48, 1
        %s746 = scalar_select %p745, %s48, 1
        %s747 = scalar_lea.vmem %s8, %s746
        %p748 = pneg %p284
        %p749 = pneg %p281
        %p750 = scmp.lt.s32.totalorder %s48, 1
        %s751 = scalar_select %p750, %s48, 1
        %s752 = scalar_lea.vmem %s9, %s751
        %p753 = pneg %p310
        %p754 = pneg %p307
        %p755 = scmp.lt.s32.totalorder %s48, 1
        %s756 = scalar_select %p755, %s48, 1
        %s757 = scalar_lea.vmem %s10, %s756
        %p758 = pneg %p336
        %p759 = pneg %p333
        %p760 = scmp.lt.s32.totalorder %s48, 1
        %s761 = scalar_select %p760, %s48, 1
        %s762 = scalar_lea.vmem %s11, %s761
        %p763 = pneg %p362
        %p764 = pneg %p359
        %p765 = pneg %p383
        %p766 = pneg %p380
        %p767 = pneg %p404
        %p768 = pneg %p401
        %p769 = pneg %p430
        %p770 = pneg %p427
        %s771 = sand.u32 %s417, 1
        %s772 = scalar_lea.sflag [#allocation4], %s771
        %s773 = sand.u32 %s417, 1
        %s774 = smul.addr %s773, 8
        %s775 = scalar_lea.vmem [#allocation13], %s774
        %p776 = pneg %p456
        %p777 = pneg %p453
        %s778 = sand.u32 %s443, 1
        %s779 = scalar_lea.sflag [#allocation15], %s778
        %s780 = sand.u32 %s443, 1
        %s781 = smul.addr %s780, 16
        %s782 = scalar_lea.vmem [#allocation14], %s781
        %p783 = scmp.lt.s32.totalorder %s48, 1
        %s784 = scalar_select %p783, %s48, 1
        %s785 = smul.addr %s784, 2
        %s786 = scalar_lea.vmem %s3, %s785
        %p787 = scmp.lt.s32.totalorder %s48, 1
        %s788 = scalar_select %p787, %s48, 1
        %s789 = smul.addr %s788, 2
        %s790 = scalar_lea.vmem %s5, %s789
        %p791 = scmp.lt.s32.totalorder %s48, 1
        %s792 = scalar_select %p791, %s48, 1
        %s793 = scalar_lea.vmem %s7, %s792
        %p794 = scmp.lt.s32.totalorder %s48, 1
        %s795 = scalar_select %p794, %s48, 1
        %s796 = scalar_lea.vmem %s8, %s795
        %p797 = scmp.lt.s32.totalorder %s48, 1
        %s798 = scalar_select %p797, %s48, 1
        %s799 = scalar_lea.vmem %s9, %s798
        %p800 = scmp.lt.s32.totalorder %s48, 1
        %s801 = scalar_select %p800, %s48, 1
        %s802 = scalar_lea.vmem %s10, %s801
        %p803 = scmp.lt.s32.totalorder %s48, 1
        %s804 = scalar_select %p803, %s48, 1
        %s805 = scalar_lea.vmem %s11, %s804
        %p806 = scmp.eq.s32.totalorder %s48, 0
        // Predicated region
        $region101: #{tpu_custom_call.1} parent=75 // pred_check
          %p807 = pneg %p806
        $region102: #{tpu_custom_call.1} parent=75 // pred_check_branch
          %809 = sbr.rel (%p807) target = $region104
        $region103: #{tpu_custom_call.1} parent=75 // pred_region
          %v810 = vld [vmem:[%s648] sm:$0xff]
          %vm811 = vcmask 261120
          %812 = vst.msk [vmem:[%s775] sm:$0xff] %vm811, %v810
          %v813 = vld [vmem:[%s657] sm:$0xff]
          %v814 = vld [vmem:[%s657 + $0x8] sm:$0xff]
          %815 = vst [vmem:[%s782] sm:$0xff] %v813
          %816 = vst [vmem:[%s782 + $0x8] sm:$0xff] %v814
        $region104: #{tpu_custom_call.1} parent=75 // pred_fallthru
          _
        %v817 = vld [vmem:[%s775] sm:$0xff]
        %v818 = vld [vmem:[%s782] sm:$0xff]
        %v819 = vld [vmem:[%s782 + $0x8] sm:$0xff]
        %v820 = vld [vmem:[%s666] sm:$0xff]
        %v821 = vld [vmem:[%s666 + $0x8] sm:$0xff]
        %v822 = vld [vmem:[%s666 + $0x10] sm:$0xff]
        %v823 = vld [vmem:[%s666 + $0x18] sm:$0xff]
        %v824 = vld [vmem:[%s666 + $0x20] sm:$0xff]
        %v825 = vld [vmem:[%s666 + $0x28] sm:$0xff]
        %v826 = vld [vmem:[%s666 + $0x30] sm:$0xff]
        %v827 = vld [vmem:[%s666 + $0x38] sm:$0xff]
        %v828 = vld [vmem:[%s786] sm:$0x3]
        %v830 = vlaneseq
        %v831 = vshrl.u32 %v830, 7
        %v832 = vsub.s32 0, %v831
        %v833 = vrot.slane %v828, %v832
        %v834 = vlaneseq
        %v835 = vshrl.u32 %v834, 7
        %v836 = vsub.s32 1, %v835
        %v837 = vrot.slane %v828, %v836
        %vm840 = vcmask 261120
        %v842 = vsel %vm840, %v817, 0
        %844 = vmatprep.subr.mxu0 %v821
        %845 = vmatpush1.msra.mxu0 %v820
        %846 = vmatprep.subr.mxu0 %v823
        %847 = vmatpush1.msra.mxu0 %v822
        %848 = vmatprep.subr.mxu0 %v825
        %849 = vmatpush1.msra.mxu0 %v824
        %850 = vmatprep.subr.mxu0 %v827
        %851 = vmatpush1.msra.mxu0 %v826
        %852 = vmatprep.subr.mxu0 0.0
        %853 = vmatpush1.msra.mxu0 0.0
        %854 = vmatprep.subr.mxu0 0.0
        %855 = vmatpush1.msra.mxu0 0.0
        %856 = vmatprep.subr.mxu0 0.0
        %857 = vmatpush1.msra.mxu0 0.0
        %858 = vmatprep.subr.mxu0 0.0
        %859 = vmatpush1.msra.mxu0 0.0
        %860 = vmatprep.subr.mxu0 0.0
        %861 = vmatpush1.msra.mxu0 0.0
        %862 = vmatprep.subr.mxu0 0.0
        %863 = vmatpush1.msra.mxu0 0.0
        %864 = vmatprep.subr.mxu0 0.0
        %865 = vmatpush1.msra.mxu0 0.0
        %866 = vmatprep.subr.mxu0 0.0
        %867 = vmatpush1.msra.mxu0 0.0
        %868 = vmatprep.subr.mxu0 0.0
        %869 = vmatpush1.msra.mxu0 0.0
        %870 = vmatprep.subr.mxu0 0.0
        %871 = vmatpush1.msra.mxu0 0.0
        %872 = vmatprep.subr.mxu0 0.0
        %873 = vmatpush1.msra.mxu0 0.0
        %874 = vmatprep.subr.mxu0 0.0
        %875 = vmatpush1.msra.mxu0 0.0
        %876 = vmatprep.subr.mxu0 0.0
        %877 = vmatpush1.msra.mxu0 0.0
        %878 = vmatprep.subr.mxu0 0.0
        %879 = vmatpush1.msra.mxu0 0.0
        %880 = vmatprep.subr.mxu0 0.0
        %881 = vmatpush1.msra.mxu0 0.0
        %882 = vmatprep.subr.mxu0 0.0
        %883 = vmatpush1.msra.mxu0 0.0
        %884 = vmatprep.subr.mxu0 0.0
        %885 = vmatpush1.msra.mxu0 0.0
        %886 = vmatprep.subr.mxu0 0.0
        %887 = vmatpush1.msra.mxu0 0.0
        %888 = vmatprep.subr.mxu0 0.0
        %889 = vmatpush1.msra.mxu0 0.0
        %890 = vmatprep.subr.mxu0 0.0
        %891 = vmatpush1.msra.mxu0 0.0
        %892 = vmatprep.subr.mxu0 0.0
        %893 = vmatpush1.msra.mxu0 0.0
        %894 = vmatprep.subr.mxu0 0.0
        %895 = vmatpush1.msra.mxu0 0.0
        %896 = vmatprep.subr.mxu0 0.0
        %897 = vmatpush1.msra.mxu0 0.0
        %898 = vmatprep.subr.mxu0 0.0
        %899 = vmatpush1.msra.mxu0 0.0
        %900 = vmatprep.subr.mxu0 0.0
        %901 = vmatpush1.msra.mxu0 0.0
        %902 = vmatprep.subr.mxu0 0.0
        %903 = vmatpush1.msra.mxu0 0.0
        %904 = vmatprep.subr.mxu0 0.0
        %905 = vmatpush1.msra.mxu0 0.0
        %906 = vmatprep.subr.mxu0 0.0
        %907 = vmatpush1.msra.mxu0 0.0
        %908 = vmatprep.mubr.f32.mxu0 0.0
        %909 = vmatmul.mubr.f32.gmra.mrb[0].mxu0 %v842
        %v910 = vpop.f32.mrb[0].mxu0
        %v911 = vadd.f32 %v833, %v910
        %v912 = vpop.f32.mrb[0].mxu0
        %v913 = vadd.f32 %v837, %v912
        %914 = vdwg.mxu0
        %v915 = vld [vmem:[%s13] sm:$0xff]
        %vm916 = vcmask 64512
        %v918 = vsel %vm916, %v915, 0
        %920 = vmatprep.subr.mxu0 0.0
        %921 = vmatpush1.msra.mxu0 %v817
        %922 = vmatprep.subr.mxu0 0.0
        %923 = vmatpush1.msra.mxu0 0.0
        %924 = vmatprep.subr.mxu0 0.0
        %925 = vmatpush1.msra.mxu0 0.0
        %926 = vmatprep.subr.mxu0 0.0
        %927 = vmatpush1.msra.mxu0 0.0
        %928 = vmatprep.subr.mxu0 0.0
        %929 = vmatpush1.msra.mxu0 0.0
        %930 = vmatprep.subr.mxu0 0.0
        %931 = vmatpush1.msra.mxu0 0.0
        %932 = vmatprep.subr.mxu0 0.0
        %933 = vmatpush1.msra.mxu0 0.0
        %934 = vmatprep.subr.mxu0 0.0
        %935 = vmatpush1.msra.mxu0 0.0
        %936 = vmatprep.subr.mxu0 0.0
        %937 = vmatpush1.msra.mxu0 0.0
        %938 = vmatprep.subr.mxu0 0.0
        %939 = vmatpush1.msra.mxu0 0.0
        %940 = vmatprep.subr.mxu0 0.0
        %941 = vmatpush1.msra.mxu0 0.0
        %942 = vmatprep.subr.mxu0 0.0
        %943 = vmatpush1.msra.mxu0 0.0
        %944 = vmatprep.subr.mxu0 0.0
        %945 = vmatpush1.msra.mxu0 0.0
        %946 = vmatprep.subr.mxu0 0.0
        %947 = vmatpush1.msra.mxu0 0.0
        %948 = vmatprep.subr.mxu0 0.0
        %949 = vmatpush1.msra.mxu0 0.0
        %950 = vmatprep.subr.mxu0 0.0
        %951 = vmatpush1.msra.mxu0 0.0
        %952 = vmatprep.subr.mxu0 0.0
        %953 = vmatpush1.msra.mxu0 0.0
        %954 = vmatprep.subr.mxu0 0.0
        %955 = vmatpush1.msra.mxu0 0.0
        %956 = vmatprep.subr.mxu0 0.0
        %957 = vmatpush1.msra.mxu0 0.0
        %958 = vmatprep.subr.mxu0 0.0
        %959 = vmatpush1.msra.mxu0 0.0
        %960 = vmatprep.subr.mxu0 0.0
        %961 = vmatpush1.msra.mxu0 0.0
        %962 = vmatprep.subr.mxu0 0.0
        %963 = vmatpush1.msra.mxu0 0.0
        %964 = vmatprep.subr.mxu0 0.0
        %965 = vmatpush1.msra.mxu0 0.0
        %966 = vmatprep.subr.mxu0 0.0
        %967 = vmatpush1.msra.mxu0 0.0
        %968 = vmatprep.subr.mxu0 0.0
        %969 = vmatpush1.msra.mxu0 0.0
        %970 = vmatprep.subr.mxu0 0.0
        %971 = vmatpush1.msra.mxu0 0.0
        %972 = vmatprep.subr.mxu0 0.0
        %973 = vmatpush1.msra.mxu0 0.0
        %974 = vmatprep.subr.mxu0 0.0
        %975 = vmatpush1.msra.mxu0 0.0
        %976 = vmatprep.subr.mxu0 0.0
        %977 = vmatpush1.msra.mxu0 0.0
        %978 = vmatprep.subr.mxu0 0.0
        %979 = vmatpush1.msra.mxu0 0.0
        %980 = vmatprep.subr.mxu0 0.0
        %981 = vmatpush1.msra.mxu0 0.0
        %982 = vmatprep.subr.mxu0 0.0
        %983 = vmatpush1.msra.mxu0 0.0
        %984 = vmatprep.mubr.f32.mxu0 0.0
        %985 = vmatmul.mubr.f32.gmra.mrb[0].mxu0 %v918
        %v986 = vpop.f32.mrb[0].mxu0
        %v987 = vadd.f32 0.0, %v986
        %v988 = vpop.f32.mrb[0].mxu0
        %989 = vdwg.mxu0
        %v990 = vld [vmem:[%s675] sm:$0xff]
        %v991 = vld [vmem:[%s675 + $0x8] sm:$0xff]
        %v992 = vld [vmem:[%s675 + $0x10] sm:$0xff]
        %v993 = vld [vmem:[%s675 + $0x18] sm:$0xff]
        %v994 = vld [vmem:[%s675 + $0x20] sm:$0xff]
        %v995 = vld [vmem:[%s675 + $0x28] sm:$0xff]
        %v996 = vld [vmem:[%s675 + $0x30] sm:$0xff]
        %v997 = vld [vmem:[%s675 + $0x38] sm:$0xff]
        %v998 = vld [vmem:[%s675 + $0x40] sm:$0xff]
        %v999 = vld [vmem:[%s675 + $0x48] sm:$0xff]
        %v1000 = vld [vmem:[%s675 + $0x50] sm:$0xff]
        %v1001 = vld [vmem:[%s675 + $0x58] sm:$0xff]
        %v1002 = vld [vmem:[%s675 + $0x60] sm:$0xff]
        %v1003 = vld [vmem:[%s675 + $0x68] sm:$0xff]
        %v1004 = vld [vmem:[%s675 + $0x70] sm:$0xff]
        %v1005 = vld [vmem:[%s675 + $0x78] sm:$0xff]
        %v1006 = vld [vmem:[%s675 + $0x80] sm:$0xff]
        %v1007 = vld [vmem:[%s675 + $0x88] sm:$0xff]
        %v1008 = vld [vmem:[%s675 + $0x90] sm:$0xff]
        %v1009 = vld [vmem:[%s675 + $0x98] sm:$0xff]
        %v1010 = vld [vmem:[%s675 + $0xa0] sm:$0xff]
        %v1011 = vld [vmem:[%s675 + $0xa8] sm:$0xff]
        %v1012 = vld [vmem:[%s675 + $0xb0] sm:$0xff]
        %v1013 = vld [vmem:[%s675 + $0xb8] sm:$0xff]
        %v1014 = vld [vmem:[%s675 + $0xc0] sm:$0xff]
        %v1015 = vld [vmem:[%s675 + $0xc8] sm:$0xff]
        %v1016 = vld [vmem:[%s675 + $0xd0] sm:$0xff]
        %v1017 = vld [vmem:[%s675 + $0xd8] sm:$0xff]
        %v1018 = vld [vmem:[%s675 + $0xe0] sm:$0xff]
        %v1019 = vld [vmem:[%s675 + $0xe8] sm:$0xff]
        %v1020 = vld [vmem:[%s675 + $0xf0] sm:$0xff]
        %v1021 = vld [vmem:[%s675 + $0xf8] sm:$0xff]
        %v1022 = vld [vmem:[%s790] sm:$0x3]
        %v1024 = vsel %vm840, %v987, 0
        %1026 = vmatprep.subr.mxu0 %v991
        %1027 = vmatpush1.msra.mxu0 %v990
        %1028 = vmatprep.subr.mxu0 %v993
        %1029 = vmatpush1.msra.mxu0 %v992
        %1030 = vmatprep.subr.mxu0 %v995
        %1031 = vmatpush1.msra.mxu0 %v994
        %1032 = vmatprep.subr.mxu0 %v997
        %1033 = vmatpush1.msra.mxu0 %v996
        %1034 = vmatprep.subr.mxu0 0.0
        %1035 = vmatpush1.msra.mxu0 0.0
        %1036 = vmatprep.subr.mxu0 0.0
        %1037 = vmatpush1.msra.mxu0 0.0
        %1038 = vmatprep.subr.mxu0 0.0
        %1039 = vmatpush1.msra.mxu0 0.0
        %1040 = vmatprep.subr.mxu0 0.0
        %1041 = vmatpush1.msra.mxu0 0.0
        %1042 = vmatprep.subr.mxu0 0.0
        %1043 = vmatpush1.msra.mxu0 0.0
        %1044 = vmatprep.subr.mxu0 0.0
        %1045 = vmatpush1.msra.mxu0 0.0
        %1046 = vmatprep.subr.mxu0 0.0
        %1047 = vmatpush1.msra.mxu0 0.0
        %1048 = vmatprep.subr.mxu0 0.0
        %1049 = vmatpush1.msra.mxu0 0.0
        %1050 = vmatprep.subr.mxu0 0.0
        %1051 = vmatpush1.msra.mxu0 0.0
        %1052 = vmatprep.subr.mxu0 0.0
        %1053 = vmatpush1.msra.mxu0 0.0
        %1054 = vmatprep.subr.mxu0 0.0
        %1055 = vmatpush1.msra.mxu0 0.0
        %1056 = vmatprep.subr.mxu0 0.0
        %1057 = vmatpush1.msra.mxu0 0.0
        %1058 = vmatprep.subr.mxu0 0.0
        %1059 = vmatpush1.msra.mxu0 0.0
        %1060 = vmatprep.subr.mxu0 0.0
        %1061 = vmatpush1.msra.mxu0 0.0
        %1062 = vmatprep.subr.mxu0 0.0
        %1063 = vmatpush1.msra.mxu0 0.0
        %1064 = vmatprep.subr.mxu0 0.0
        %1065 = vmatpush1.msra.mxu0 0.0
        %1066 = vmatprep.subr.mxu0 0.0
        %1067 = vmatpush1.msra.mxu0 0.0
        %1068 = vmatprep.subr.mxu0 0.0
        %1069 = vmatpush1.msra.mxu0 0.0
        %1070 = vmatprep.subr.mxu0 0.0
        %1071 = vmatpush1.msra.mxu0 0.0
        %1072 = vmatprep.subr.mxu0 0.0
        %1073 = vmatpush1.msra.mxu0 0.0
        %1074 = vmatprep.subr.mxu0 0.0
        %1075 = vmatpush1.msra.mxu0 0.0
        %1076 = vmatprep.subr.mxu0 0.0
        %1077 = vmatpush1.msra.mxu0 0.0
        %1078 = vmatprep.subr.mxu0 0.0
        %1079 = vmatpush1.msra.mxu0 0.0
        %1080 = vmatprep.subr.mxu0 0.0
        %1081 = vmatpush1.msra.mxu0 0.0
        %1082 = vmatprep.subr.mxu0 0.0
        %1083 = vmatpush1.msra.mxu0 0.0
        %1084 = vmatprep.subr.mxu0 0.0
        %1085 = vmatpush1.msra.mxu0 0.0
        %1086 = vmatprep.subr.mxu0 0.0
        %1087 = vmatpush1.msra.mxu0 0.0
        %1088 = vmatprep.subr.mxu0 0.0
        %1089 = vmatpush1.msra.mxu0 0.0
        %1090 = vmatprep.mubr.f32.mxu0 0.0
        %1091 = vmatmul.mubr.f32.gmra.mrb[0].mxu0 %v1024
        %v1092 = vpop.f32.mrb[0].mxu0
        %v1093 = vadd.f32 0.0, %v1092
        %v1094 = vpop.f32.mrb[0].mxu0
        %v1095 = vadd.f32 0.0, %v1094
        %1096 = vdwg.mxu0
        %v1098 = vlaneseq
        %v1099 = vshrl.u32 %v1098, 7
        %v1100 = vsub.s32 0, %v1099
        %v1101 = vrot.slane %v1022, %v1100
        %v1102 = vlaneseq
        %v1103 = vshrl.u32 %v1102, 7
        %v1104 = vsub.s32 1, %v1103
        %v1105 = vrot.slane %v1022, %v1104
        %v1108 = vadd.f32 %v1101, %v1093
        %v1109 = vadd.f32 %v1105, %v1095
        %v1110 = vrot.slane %v987, 2
        %v1111 = vsel %vm840, %v1110, 0
        %1113 = vmatprep.subr.mxu0 %v999
        %1114 = vmatpush1.msra.mxu0 %v998
        %1115 = vmatprep.subr.mxu0 %v1001
        %1116 = vmatpush1.msra.mxu0 %v1000
        %1117 = vmatprep.subr.mxu0 %v1003
        %1118 = vmatpush1.msra.mxu0 %v1002
        %1119 = vmatprep.subr.mxu0 %v1005
        %1120 = vmatpush1.msra.mxu0 %v1004
        %1121 = vmatprep.subr.mxu0 0.0
        %1122 = vmatpush1.msra.mxu0 0.0
        %1123 = vmatprep.subr.mxu0 0.0
        %1124 = vmatpush1.msra.mxu0 0.0
        %1125 = vmatprep.subr.mxu0 0.0
        %1126 = vmatpush1.msra.mxu0 0.0
        %1127 = vmatprep.subr.mxu0 0.0
        %1128 = vmatpush1.msra.mxu0 0.0
        %1129 = vmatprep.subr.mxu0 0.0
        %1130 = vmatpush1.msra.mxu0 0.0
        %1131 = vmatprep.subr.mxu0 0.0
        %1132 = vmatpush1.msra.mxu0 0.0
        %1133 = vmatprep.subr.mxu0 0.0
        %1134 = vmatpush1.msra.mxu0 0.0
        %1135 = vmatprep.subr.mxu0 0.0
        %1136 = vmatpush1.msra.mxu0 0.0
        %1137 = vmatprep.subr.mxu0 0.0
        %1138 = vmatpush1.msra.mxu0 0.0
        %1139 = vmatprep.subr.mxu0 0.0
        %1140 = vmatpush1.msra.mxu0 0.0
        %1141 = vmatprep.subr.mxu0 0.0
        %1142 = vmatpush1.msra.mxu0 0.0
        %1143 = vmatprep.subr.mxu0 0.0
        %1144 = vmatpush1.msra.mxu0 0.0
        %1145 = vmatprep.subr.mxu0 0.0
        %1146 = vmatpush1.msra.mxu0 0.0
        %1147 = vmatprep.subr.mxu0 0.0
        %1148 = vmatpush1.msra.mxu0 0.0
        %1149 = vmatprep.subr.mxu0 0.0
        %1150 = vmatpush1.msra.mxu0 0.0
        %1151 = vmatprep.subr.mxu0 0.0
        %1152 = vmatpush1.msra.mxu0 0.0
        %1153 = vmatprep.subr.mxu0 0.0
        %1154 = vmatpush1.msra.mxu0 0.0
        %1155 = vmatprep.subr.mxu0 0.0
        %1156 = vmatpush1.msra.mxu0 0.0
        %1157 = vmatprep.subr.mxu0 0.0
        %1158 = vmatpush1.msra.mxu0 0.0
        %1159 = vmatprep.subr.mxu0 0.0
        %1160 = vmatpush1.msra.mxu0 0.0
        %1161 = vmatprep.subr.mxu0 0.0
        %1162 = vmatpush1.msra.mxu0 0.0
        %1163 = vmatprep.subr.mxu0 0.0
        %1164 = vmatpush1.msra.mxu0 0.0
        %1165 = vmatprep.subr.mxu0 0.0
        %1166 = vmatpush1.msra.mxu0 0.0
        %1167 = vmatprep.subr.mxu0 0.0
        %1168 = vmatpush1.msra.mxu0 0.0
        %1169 = vmatprep.subr.mxu0 0.0
        %1170 = vmatpush1.msra.mxu0 0.0
        %1171 = vmatprep.subr.mxu0 0.0
        %1172 = vmatpush1.msra.mxu0 0.0
        %1173 = vmatprep.subr.mxu0 0.0
        %1174 = vmatpush1.msra.mxu0 0.0
        %1175 = vmatprep.subr.mxu0 0.0
        %1176 = vmatpush1.msra.mxu0 0.0
        %1177 = vmatprep.mubr.f32.mxu0 0.0
        %1178 = vmatmul.mubr.f32.gmra.mrb[0].mxu0 %v1111
        %v1179 = vpop.f32.mrb[0].mxu0
        %v1180 = vadd.f32 0.0, %v1179
        %v1181 = vpop.f32.mrb[0].mxu0
        %v1182 = vadd.f32 0.0, %v1181
        %1183 = vdwg.mxu0
        %v1184 = vadd.f32 %v1108, %v1180
        %v1185 = vadd.f32 %v1109, %v1182
        %v1186 = vrot.slane %v987, 4
        %v1187 = vsel %vm840, %v1186, 0
        %1189 = vmatprep.subr.mxu0 %v1007
        %1190 = vmatpush1.msra.mxu0 %v1006
        %1191 = vmatprep.subr.mxu0 %v1009
        %1192 = vmatpush1.msra.mxu0 %v1008
        %1193 = vmatprep.subr.mxu0 %v1011
        %1194 = vmatpush1.msra.mxu0 %v1010
        %1195 = vmatprep.subr.mxu0 %v1013
        %1196 = vmatpush1.msra.mxu0 %v1012
        %1197 = vmatprep.subr.mxu0 0.0
        %1198 = vmatpush1.msra.mxu0 0.0
        %1199 = vmatprep.subr.mxu0 0.0
        %1200 = vmatpush1.msra.mxu0 0.0
        %1201 = vmatprep.subr.mxu0 0.0
        %1202 = vmatpush1.msra.mxu0 0.0
        %1203 = vmatprep.subr.mxu0 0.0
        %1204 = vmatpush1.msra.mxu0 0.0
        %1205 = vmatprep.subr.mxu0 0.0
        %1206 = vmatpush1.msra.mxu0 0.0
        %1207 = vmatprep.subr.mxu0 0.0
        %1208 = vmatpush1.msra.mxu0 0.0
        %1209 = vmatprep.subr.mxu0 0.0
        %1210 = vmatpush1.msra.mxu0 0.0
        %1211 = vmatprep.subr.mxu0 0.0
        %1212 = vmatpush1.msra.mxu0 0.0
        %1213 = vmatprep.subr.mxu0 0.0
        %1214 = vmatpush1.msra.mxu0 0.0
        %1215 = vmatprep.subr.mxu0 0.0
        %1216 = vmatpush1.msra.mxu0 0.0
        %1217 = vmatprep.subr.mxu0 0.0
        %1218 = vmatpush1.msra.mxu0 0.0
        %1219 = vmatprep.subr.mxu0 0.0
        %1220 = vmatpush1.msra.mxu0 0.0
        %1221 = vmatprep.subr.mxu0 0.0
        %1222 = vmatpush1.msra.mxu0 0.0
        %1223 = vmatprep.subr.mxu0 0.0
        %1224 = vmatpush1.msra.mxu0 0.0
        %1225 = vmatprep.subr.mxu0 0.0
        %1226 = vmatpush1.msra.mxu0 0.0
        %1227 = vmatprep.subr.mxu0 0.0
        %1228 = vmatpush1.msra.mxu0 0.0
        %1229 = vmatprep.subr.mxu0 0.0
        %1230 = vmatpush1.msra.mxu0 0.0
        %1231 = vmatprep.subr.mxu0 0.0
        %1232 = vmatpush1.msra.mxu0 0.0
        %1233 = vmatprep.subr.mxu0 0.0
        %1234 = vmatpush1.msra.mxu0 0.0
        %1235 = vmatprep.subr.mxu0 0.0
        %1236 = vmatpush1.msra.mxu0 0.0
        %1237 = vmatprep.subr.mxu0 0.0
        %1238 = vmatpush1.msra.mxu0 0.0
        %1239 = vmatprep.subr.mxu0 0.0
        %1240 = vmatpush1.msra.mxu0 0.0
        %1241 = vmatprep.subr.mxu0 0.0
        %1242 = vmatpush1.msra.mxu0 0.0
        %1243 = vmatprep.subr.mxu0 0.0
        %1244 = vmatpush1.msra.mxu0 0.0
        %1245 = vmatprep.subr.mxu0 0.0
        %1246 = vmatpush1.msra.mxu0 0.0
        %1247 = vmatprep.subr.mxu0 0.0
        %1248 = vmatpush1.msra.mxu0 0.0
        %1249 = vmatprep.subr.mxu0 0.0
        %1250 = vmatpush1.msra.mxu0 0.0
        %1251 = vmatprep.subr.mxu0 0.0
        %1252 = vmatpush1.msra.mxu0 0.0
        %1253 = vmatprep.mubr.f32.mxu0 0.0
        %1254 = vmatmul.mubr.f32.gmra.mrb[0].mxu0 %v1187
        %v1255 = vpop.f32.mrb[0].mxu0
        %v1256 = vadd.f32 0.0, %v1255
        %v1257 = vpop.f32.mrb[0].mxu0
        %v1258 = vadd.f32 0.0, %v1257
        %1259 = vdwg.mxu0
        %v1260 = vadd.f32 %v1184, %v1256
        %v1261 = vadd.f32 %v1185, %v1258
        %v1262 = vrot.slane %v987, 6
        %v1263 = vsel %vm840, %v1262, 0
        %1265 = vmatprep.subr.mxu0 %v1015
        %1266 = vmatpush1.msra.mxu0 %v1014
        %1267 = vmatprep.subr.mxu0 %v1017
        %1268 = vmatpush1.msra.mxu0 %v1016
        %1269 = vmatprep.subr.mxu0 %v1019
        %1270 = vmatpush1.msra.mxu0 %v1018
        %1271 = vmatprep.subr.mxu0 %v1021
        %1272 = vmatpush1.msra.mxu0 %v1020
        %1273 = vmatprep.subr.mxu0 0.0
        %1274 = vmatpush1.msra.mxu0 0.0
        %1275 = vmatprep.subr.mxu0 0.0
        %1276 = vmatpush1.msra.mxu0 0.0
        %1277 = vmatprep.subr.mxu0 0.0
        %1278 = vmatpush1.msra.mxu0 0.0
        %1279 = vmatprep.subr.mxu0 0.0
        %1280 = vmatpush1.msra.mxu0 0.0
        %1281 = vmatprep.subr.mxu0 0.0
        %1282 = vmatpush1.msra.mxu0 0.0
        %1283 = vmatprep.subr.mxu0 0.0
        %1284 = vmatpush1.msra.mxu0 0.0
        %1285 = vmatprep.subr.mxu0 0.0
        %1286 = vmatpush1.msra.mxu0 0.0
        %1287 = vmatprep.subr.mxu0 0.0
        %1288 = vmatpush1.msra.mxu0 0.0
        %1289 = vmatprep.subr.mxu0 0.0
        %1290 = vmatpush1.msra.mxu0 0.0
        %1291 = vmatprep.subr.mxu0 0.0
        %1292 = vmatpush1.msra.mxu0 0.0
        %1293 = vmatprep.subr.mxu0 0.0
        %1294 = vmatpush1.msra.mxu0 0.0
        %1295 = vmatprep.subr.mxu0 0.0
        %1296 = vmatpush1.msra.mxu0 0.0
        %1297 = vmatprep.subr.mxu0 0.0
        %1298 = vmatpush1.msra.mxu0 0.0
        %1299 = vmatprep.subr.mxu0 0.0
        %1300 = vmatpush1.msra.mxu0 0.0
        %1301 = vmatprep.subr.mxu0 0.0
        %1302 = vmatpush1.msra.mxu0 0.0
        %1303 = vmatprep.subr.mxu0 0.0
        %1304 = vmatpush1.msra.mxu0 0.0
        %1305 = vmatprep.subr.mxu0 0.0
        %1306 = vmatpush1.msra.mxu0 0.0
        %1307 = vmatprep.subr.mxu0 0.0
        %1308 = vmatpush1.msra.mxu0 0.0
        %1309 = vmatprep.subr.mxu0 0.0
        %1310 = vmatpush1.msra.mxu0 0.0
        %1311 = vmatprep.subr.mxu0 0.0
        %1312 = vmatpush1.msra.mxu0 0.0
        %1313 = vmatprep.subr.mxu0 0.0
        %1314 = vmatpush1.msra.mxu0 0.0
        %1315 = vmatprep.subr.mxu0 0.0
        %1316 = vmatpush1.msra.mxu0 0.0
        %1317 = vmatprep.subr.mxu0 0.0
        %1318 = vmatpush1.msra.mxu0 0.0
        %1319 = vmatprep.subr.mxu0 0.0
        %1320 = vmatpush1.msra.mxu0 0.0
        %1321 = vmatprep.subr.mxu0 0.0
        %1322 = vmatpush1.msra.mxu0 0.0
        %1323 = vmatprep.subr.mxu0 0.0
        %1324 = vmatpush1.msra.mxu0 0.0
        %1325 = vmatprep.subr.mxu0 0.0
        %1326 = vmatpush1.msra.mxu0 0.0
        %1327 = vmatprep.subr.mxu0 0.0
        %1328 = vmatpush1.msra.mxu0 0.0
        %1329 = vmatprep.mubr.f32.mxu0 0.0
        %1330 = vmatmul.mubr.f32.gmra.mrb[0].mxu0 %v1263
        %v1331 = vpop.f32.mrb[0].mxu0
        %v1332 = vadd.f32 0.0, %v1331
        %v1333 = vpop.f32.mrb[0].mxu0
        %v1334 = vadd.f32 0.0, %v1333
        %1335 = vdwg.mxu0
        %v1336 = vadd.f32 %v1260, %v1332
        %v1337 = vadd.f32 %v1261, %v1334
        %v1338 = vld [vmem:[%s684] sm:$0xff]
        %v1339 = vld [vmem:[%s684 + $0x8] sm:$0xff]
        %v1340 = vld [vmem:[%s684 + $0x10] sm:$0xff]
        %v1341 = vld [vmem:[%s684 + $0x18] sm:$0xff]
        %v1342 = vld [vmem:[%s684 + $0x20] sm:$0xff]
        %v1343 = vld [vmem:[%s684 + $0x28] sm:$0xff]
        %v1344 = vld [vmem:[%s684 + $0x30] sm:$0xff]
        %v1345 = vld [vmem:[%s684 + $0x38] sm:$0xff]
        %v1346 = vld [vmem:[%s684 + $0x40] sm:$0xff]
        %v1347 = vld [vmem:[%s684 + $0x48] sm:$0xff]
        %v1348 = vld [vmem:[%s684 + $0x50] sm:$0xff]
        %v1349 = vld [vmem:[%s684 + $0x58] sm:$0xff]
        %v1350 = vld [vmem:[%s684 + $0x60] sm:$0xff]
        %v1351 = vld [vmem:[%s684 + $0x68] sm:$0xff]
        %v1352 = vld [vmem:[%s684 + $0x70] sm:$0xff]
        %v1353 = vld [vmem:[%s684 + $0x78] sm:$0xff]
        %v1354 = vld [vmem:[%s793] sm:$0x1]
        %v1356 = vlaneseq
        %v1357 = vshrl.u32 %v1356, 7
        %v1358 = vsub.s32 0, %v1357
        %v1359 = vrot.slane %v1354, %v1358
        %1361 = vmatprep.subr.mxu0 0.0
        %1362 = vmatpush1.msra.mxu0 %v1338
        %1363 = vmatprep.subr.mxu0 0.0
        %1364 = vmatpush1.msra.mxu0 %v1339
        %1365 = vmatprep.subr.mxu0 0.0
        %1366 = vmatpush1.msra.mxu0 %v1340
        %1367 = vmatprep.subr.mxu0 0.0
        %1368 = vmatpush1.msra.mxu0 %v1341
        %1369 = vmatprep.subr.mxu0 0.0
        %1370 = vmatpush1.msra.mxu0 %v1342
        %1371 = vmatprep.subr.mxu0 0.0
        %1372 = vmatpush1.msra.mxu0 %v1343
        %1373 = vmatprep.subr.mxu0 0.0
        %1374 = vmatpush1.msra.mxu0 %v1344
        %1375 = vmatprep.subr.mxu0 0.0
        %1376 = vmatpush1.msra.mxu0 %v1345
        %1377 = vmatprep.subr.mxu0 0.0
        %1378 = vmatpush1.msra.mxu0 %v1346
        %1379 = vmatprep.subr.mxu0 0.0
        %1380 = vmatpush1.msra.mxu0 %v1347
        %1381 = vmatprep.subr.mxu0 0.0
        %1382 = vmatpush1.msra.mxu0 %v1348
        %1383 = vmatprep.subr.mxu0 0.0
        %1384 = vmatpush1.msra.mxu0 %v1349
        %1385 = vmatprep.subr.mxu0 0.0
        %1386 = vmatpush1.msra.mxu0 %v1350
        %1387 = vmatprep.subr.mxu0 0.0
        %1388 = vmatpush1.msra.mxu0 %v1351
        %1389 = vmatprep.subr.mxu0 0.0
        %1390 = vmatpush1.msra.mxu0 %v1352
        %1391 = vmatprep.subr.mxu0 0.0
        %1392 = vmatpush1.msra.mxu0 %v1353
        %1393 = vmatprep.subr.mxu0 0.0
        %1394 = vmatpush1.msra.mxu0 0.0
        %1395 = vmatprep.subr.mxu0 0.0
        %1396 = vmatpush1.msra.mxu0 0.0
        %1397 = vmatprep.subr.mxu0 0.0
        %1398 = vmatpush1.msra.mxu0 0.0
        %1399 = vmatprep.subr.mxu0 0.0
        %1400 = vmatpush1.msra.mxu0 0.0
        %1401 = vmatprep.subr.mxu0 0.0
        %1402 = vmatpush1.msra.mxu0 0.0
        %1403 = vmatprep.subr.mxu0 0.0
        %1404 = vmatpush1.msra.mxu0 0.0
        %1405 = vmatprep.subr.mxu0 0.0
        %1406 = vmatpush1.msra.mxu0 0.0
        %1407 = vmatprep.subr.mxu0 0.0
        %1408 = vmatpush1.msra.mxu0 0.0
        %1409 = vmatprep.subr.mxu0 0.0
        %1410 = vmatpush1.msra.mxu0 0.0
        %1411 = vmatprep.subr.mxu0 0.0
        %1412 = vmatpush1.msra.mxu0 0.0
        %1413 = vmatprep.subr.mxu0 0.0
        %1414 = vmatpush1.msra.mxu0 0.0
        %1415 = vmatprep.subr.mxu0 0.0
        %1416 = vmatpush1.msra.mxu0 0.0
        %1417 = vmatprep.subr.mxu0 0.0
        %1418 = vmatpush1.msra.mxu0 0.0
        %1419 = vmatprep.subr.mxu0 0.0
        %1420 = vmatpush1.msra.mxu0 0.0
        %1421 = vmatprep.subr.mxu0 0.0
        %1422 = vmatpush1.msra.mxu0 0.0
        %1423 = vmatprep.subr.mxu0 0.0
        %1424 = vmatpush1.msra.mxu0 0.0
        %1425 = vmatprep.mubr.f32.mxu0 0.0
        %1426 = vmatmul.mubr.f32.gmra.mrb[0].mxu0 %v818
        %v1427 = vpop.f32.mrb[0].mxu0
        %v1428 = vadd.f32 %v1359, %v1427
        %v1429 = vpop.f32.mrb[0].mxu0
        %1430 = vmatprep.mubr.f32.mxu0 0.0
        %1431 = vmatmul.mubr.f32.gmra.mrb[0].mxu0 %v819
        %v1432 = vpop.f32.mrb[0].mxu0
        %v1433 = vadd.f32 %v1359, %v1432
        %v1434 = vpop.f32.mrb[0].mxu0
        %1435 = vdwg.mxu0
        %v1437 = vcombine.high %v911, %v911
        %v1439 = vunpack.c.l.s4 1966171168
        %v1440 = vunpack.c.0.s8 %v1439
        %v1441 = vlaneseq
        %v1442 = vshrl.u32 %v1441, 7
        %v1443 = vsub.s32 %v1440, %v1442
        %v1444 = vrot.slane %v911, %v1443
        %v1446 = vunpack.c.l.s4 1966171168
        %v1447 = vunpack.c.0.s8 %v1446
        %v1448 = vlaneseq
        %v1449 = vshrl.u32 %v1448, 7
        %v1450 = vsub.s32 %v1447, %v1449
        %v1451 = vrot.slane %v1437, %v1450
        %v1452 = vcombine.high %v1444, %v1444
        %v1453 = vcombine.high %v1451, %v1451
        %v1455 = vunpack.c.l.s4 1966171168
        %v1456 = vunpack.c.0.s8 %v1455
        %v1457 = vlaneseq
        %v1458 = vshrl.u32 %v1457, 7
        %v1459 = vsub.s32 %v1456, %v1458
        %v1460 = vrot.slane %v1444, %v1459
        %v1462 = vunpack.c.l.s4 1966171168
        %v1463 = vunpack.c.0.s8 %v1462
        %v1464 = vlaneseq
        %v1465 = vshrl.u32 %v1464, 7
        %v1466 = vsub.s32 %v1463, %v1465
        %v1467 = vrot.slane %v1451, %v1466
        %v1469 = vunpack.c.l.s4 1966171168
        %v1470 = vunpack.c.0.s8 %v1469
        %v1471 = vlaneseq
        %v1472 = vshrl.u32 %v1471, 7
        %v1473 = vsub.s32 %v1470, %v1472
        %v1474 = vrot.slane %v1452, %v1473
        %v1476 = vunpack.c.l.s4 1966171168
        %v1477 = vunpack.c.0.s8 %v1476
        %v1478 = vlaneseq
        %v1479 = vshrl.u32 %v1478, 7
        %v1480 = vsub.s32 %v1477, %v1479
        %v1481 = vrot.slane %v1453, %v1480
        %v1482 = vcombine.high %v1460, %v1460
        %v1483 = vcombine.high %v1467, %v1467
        %v1484 = vcombine.high %v1474, %v1474
        %v1485 = vcombine.high %v1481, %v1481
        %v1486 = vlaneseq
        %v1487 = vshrl.u32 %v1486, 7
        %v1488 = vsub.s32 0, %v1487
        %v1489 = vrot.slane %v1460, %v1488
        %v1490 = vlaneseq
        %v1491 = vshrl.u32 %v1490, 7
        %v1492 = vsub.s32 0, %v1491
        %v1493 = vrot.slane %v1474, %v1492
        %v1494 = vlaneseq
        %v1495 = vshrl.u32 %v1494, 7
        %v1496 = vsub.s32 0, %v1495
        %v1497 = vrot.slane %v1482, %v1496
        %v1498 = vlaneseq
        %v1499 = vshrl.u32 %v1498, 7
        %v1500 = vsub.s32 0, %v1499
        %v1501 = vrot.slane %v1484, %v1500
        %v1502 = vlaneseq
        %v1503 = vshrl.u32 %v1502, 7
        %v1504 = vsub.s32 0, %v1503
        %v1505 = vrot.slane %v1467, %v1504
        %v1506 = vlaneseq
        %v1507 = vshrl.u32 %v1506, 7
        %v1508 = vsub.s32 0, %v1507
        %v1509 = vrot.slane %v1481, %v1508
        %v1510 = vlaneseq
        %v1511 = vshrl.u32 %v1510, 7
        %v1512 = vsub.s32 0, %v1511
        %v1513 = vrot.slane %v1483, %v1512
        %v1514 = vlaneseq
        %v1515 = vshrl.u32 %v1514, 7
        %v1516 = vsub.s32 0, %v1515
        %v1517 = vrot.slane %v1485, %v1516
        %v1526 = vadd.f32 %v1489, %v1336
        %v1527 = vadd.f32 %v1493, %v1336
        %v1528 = vadd.f32 %v1497, %v1336
        %v1529 = vadd.f32 %v1501, %v1336
        %v1530 = vadd.f32 %v1505, %v1336
        %v1531 = vadd.f32 %v1509, %v1336
        %v1532 = vadd.f32 %v1513, %v1336
        %v1533 = vadd.f32 %v1517, %v1336
        %v1536 = vcombine.high %v1428, %v1428
        %v1538 = vunpack.c.l.s4 1983009808
        %v1539 = vunpack.c.0.s8 %v1538
        %v1540 = vlaneseq
        %v1541 = vshrl.u32 %v1540, 7
        %v1542 = vsub.s32 %v1539, %v1541
        %v1543 = vrot.slane %v1428, %v1542
        %v1545 = vunpack.c.l.s4 1983009808
        %v1546 = vunpack.c.0.s8 %v1545
        %v1547 = vlaneseq
        %v1548 = vshrl.u32 %v1547, 7
        %v1549 = vsub.s32 %v1546, %v1548
        %v1550 = vrot.slane %v1536, %v1549
        %v1551 = vcombine.high %v1543, %v1543
        %v1552 = vcombine.high %v1550, %v1550
        %v1553 = vcombine.high %v1433, %v1433
        %v1555 = vunpack.c.l.s4 1983009808
        %v1556 = vunpack.c.0.s8 %v1555
        %v1557 = vlaneseq
        %v1558 = vshrl.u32 %v1557, 7
        %v1559 = vsub.s32 %v1556, %v1558
        %v1560 = vrot.slane %v1433, %v1559
        %v1562 = vunpack.c.l.s4 1983009808
        %v1563 = vunpack.c.0.s8 %v1562
        %v1564 = vlaneseq
        %v1565 = vshrl.u32 %v1564, 7
        %v1566 = vsub.s32 %v1563, %v1565
        %v1567 = vrot.slane %v1553, %v1566
        %v1568 = vcombine.high %v1560, %v1560
        %v1569 = vcombine.high %v1567, %v1567
        %v1578 = vadd.f32 %v1526, %v1543
        %v1579 = vadd.f32 %v1527, %v1551
        %v1580 = vadd.f32 %v1528, %v1550
        %v1581 = vadd.f32 %v1529, %v1552
        %v1582 = vadd.f32 %v1530, %v1560
        %v1583 = vadd.f32 %v1531, %v1568
        %v1584 = vadd.f32 %v1532, %v1567
        %v1585 = vadd.f32 %v1533, %v1569
        %v1586 = vld [vmem:[#allocation11] sm:$0xff]
        %v1587 = vld [vmem:[#allocation11 + $0x8] sm:$0xff]
        %v1588 = vld [vmem:[#allocation11 + $0x10] sm:$0xff]
        %v1589 = vld [vmem:[#allocation11 + $0x18] sm:$0xff]
        %v1590 = vld [vmem:[#allocation11 + $0x20] sm:$0xff]
        %v1591 = vld [vmem:[#allocation11 + $0x28] sm:$0xff]
        %v1592 = vld [vmem:[#allocation11 + $0x30] sm:$0xff]
        %v1593 = vld [vmem:[#allocation11 + $0x38] sm:$0xff]
        %v1594 = vld [vmem:[#allocation11 + $0x40] sm:$0xff]
        %v1595 = vld [vmem:[#allocation11 + $0x48] sm:$0xff]
        %v1596 = vld [vmem:[#allocation11 + $0x50] sm:$0xff]
        %v1597 = vld [vmem:[#allocation11 + $0x58] sm:$0xff]
        %v1598 = vld [vmem:[#allocation11 + $0x60] sm:$0xff]
        %v1599 = vld [vmem:[#allocation11 + $0x68] sm:$0xff]
        %v1600 = vld [vmem:[#allocation11 + $0x70] sm:$0xff]
        %v1601 = vld [vmem:[#allocation11 + $0x78] sm:$0xff]
        %v1610 = vcombine.low %v1578, %v1579
        %v1611 = vcombine.low %v1580, %v1581
        %v1613 = vunpack.c.l.s4 1983009808
        %v1614 = vunpack.c.0.s8 %v1613
        %v1615 = vlaneseq
        %v1616 = vshrl.u32 %v1615, 7
        %v1617 = vsub.s32 %v1614, %v1616
        %v1618 = vrot.slane %v1610, %v1617
        %v1620 = vunpack.c.l.s4 1983009808
        %v1621 = vunpack.c.0.s8 %v1620
        %v1622 = vlaneseq
        %v1623 = vshrl.u32 %v1622, 7
        %v1624 = vsub.s32 %v1621, %v1623
        %v1625 = vrot.slane %v1611, %v1624
        %v1626 = vcombine.low %v1618, %v1625
        %v1627 = vcombine.low %v1582, %v1583
        %v1628 = vcombine.low %v1584, %v1585
        %v1630 = vunpack.c.l.s4 1983009808
        %v1631 = vunpack.c.0.s8 %v1630
        %v1632 = vlaneseq
        %v1633 = vshrl.u32 %v1632, 7
        %v1634 = vsub.s32 %v1631, %v1633
        %v1635 = vrot.slane %v1627, %v1634
        %v1637 = vunpack.c.l.s4 1983009808
        %v1638 = vunpack.c.0.s8 %v1637
        %v1639 = vlaneseq
        %v1640 = vshrl.u32 %v1639, 7
        %v1641 = vsub.s32 %v1638, %v1640
        %v1642 = vrot.slane %v1628, %v1641
        %v1643 = vcombine.low %v1635, %v1642
        %1646 = vmatprep.subr.mxu0 0.0
        %1647 = vmatpush1.msra.mxu0 %v1586
        %1648 = vmatprep.subr.mxu0 0.0
        %1649 = vmatpush1.msra.mxu0 %v1587
        %1650 = vmatprep.subr.mxu0 0.0
        %1651 = vmatpush1.msra.mxu0 %v1588
        %1652 = vmatprep.subr.mxu0 0.0
        %1653 = vmatpush1.msra.mxu0 %v1589
        %1654 = vmatprep.subr.mxu0 0.0
        %1655 = vmatpush1.msra.mxu0 %v1590
        %1656 = vmatprep.subr.mxu0 0.0
        %1657 = vmatpush1.msra.mxu0 %v1591
        %1658 = vmatprep.subr.mxu0 0.0
        %1659 = vmatpush1.msra.mxu0 %v1592
        %1660 = vmatprep.subr.mxu0 0.0
        %1661 = vmatpush1.msra.mxu0 %v1593
        %1662 = vmatprep.subr.mxu0 0.0
        %1663 = vmatpush1.msra.mxu0 %v1594
        %1664 = vmatprep.subr.mxu0 0.0
        %1665 = vmatpush1.msra.mxu0 %v1595
        %1666 = vmatprep.subr.mxu0 0.0
        %1667 = vmatpush1.msra.mxu0 %v1596
        %1668 = vmatprep.subr.mxu0 0.0
        %1669 = vmatpush1.msra.mxu0 %v1597
        %1670 = vmatprep.subr.mxu0 0.0
        %1671 = vmatpush1.msra.mxu0 %v1598
        %1672 = vmatprep.subr.mxu0 0.0
        %1673 = vmatpush1.msra.mxu0 %v1599
        %1674 = vmatprep.subr.mxu0 0.0
        %1675 = vmatpush1.msra.mxu0 %v1600
        %1676 = vmatprep.subr.mxu0 0.0
        %1677 = vmatpush1.msra.mxu0 %v1601
        %1678 = vmatprep.subr.mxu0 0.0
        %1679 = vmatpush1.msra.mxu0 0.0
        %1680 = vmatprep.subr.mxu0 0.0
        %1681 = vmatpush1.msra.mxu0 0.0
        %1682 = vmatprep.subr.mxu0 0.0
        %1683 = vmatpush1.msra.mxu0 0.0
        %1684 = vmatprep.subr.mxu0 0.0
        %1685 = vmatpush1.msra.mxu0 0.0
        %1686 = vmatprep.subr.mxu0 0.0
        %1687 = vmatpush1.msra.mxu0 0.0
        %1688 = vmatprep.subr.mxu0 0.0
        %1689 = vmatpush1.msra.mxu0 0.0
        %1690 = vmatprep.subr.mxu0 0.0
        %1691 = vmatpush1.msra.mxu0 0.0
        %1692 = vmatprep.subr.mxu0 0.0
        %1693 = vmatpush1.msra.mxu0 0.0
        %1694 = vmatprep.subr.mxu0 0.0
        %1695 = vmatpush1.msra.mxu0 0.0
        %1696 = vmatprep.subr.mxu0 0.0
        %1697 = vmatpush1.msra.mxu0 0.0
        %1698 = vmatprep.subr.mxu0 0.0
        %1699 = vmatpush1.msra.mxu0 0.0
        %1700 = vmatprep.subr.mxu0 0.0
        %1701 = vmatpush1.msra.mxu0 0.0
        %1702 = vmatprep.subr.mxu0 0.0
        %1703 = vmatpush1.msra.mxu0 0.0
        %1704 = vmatprep.subr.mxu0 0.0
        %1705 = vmatpush1.msra.mxu0 0.0
        %1706 = vmatprep.subr.mxu0 0.0
        %1707 = vmatpush1.msra.mxu0 0.0
        %1708 = vmatprep.subr.mxu0 0.0
        %1709 = vmatpush1.msra.mxu0 0.0
        %1710 = vmatprep.mubr.f32.mxu0 0.0
        %1711 = vmatmul.mubr.f32.gmra.mrb[0].mxu0 %v1626
        %v1712 = vpop.f32.mrb[0].mxu0
        %v1713 = vadd.f32 0.0, %v1712
        %v1714 = vpop.f32.mrb[0].mxu0
        %1715 = vmatprep.mubr.f32.mxu0 0.0
        %1716 = vmatmul.mubr.f32.gmra.mrb[0].mxu0 %v1643
        %v1717 = vpop.f32.mrb[0].mxu0
        %v1718 = vadd.f32 0.0, %v1717
        %v1719 = vpop.f32.mrb[0].mxu0
        %1720 = vdwg.mxu0
        %v1723 = vcombine.high %v1713, %v1713
        %v1725 = vunpack.c.l.s4 1983009808
        %v1726 = vunpack.c.0.s8 %v1725
        %v1727 = vlaneseq
        %v1728 = vshrl.u32 %v1727, 7
        %v1729 = vsub.s32 %v1726, %v1728
        %v1730 = vrot.slane %v1713, %v1729
        %v1732 = vunpack.c.l.s4 1983009808
        %v1733 = vunpack.c.0.s8 %v1732
        %v1734 = vlaneseq
        %v1735 = vshrl.u32 %v1734, 7
        %v1736 = vsub.s32 %v1733, %v1735
        %v1737 = vrot.slane %v1723, %v1736
        %v1738 = vcombine.high %v1730, %v1730
        %v1739 = vcombine.high %v1737, %v1737
        %v1740 = vcombine.high %v1718, %v1718
        %v1742 = vunpack.c.l.s4 1983009808
        %v1743 = vunpack.c.0.s8 %v1742
        %v1744 = vlaneseq
        %v1745 = vshrl.u32 %v1744, 7
        %v1746 = vsub.s32 %v1743, %v1745
        %v1747 = vrot.slane %v1718, %v1746
        %v1749 = vunpack.c.l.s4 1983009808
        %v1750 = vunpack.c.0.s8 %v1749
        %v1751 = vlaneseq
        %v1752 = vshrl.u32 %v1751, 7
        %v1753 = vsub.s32 %v1750, %v1752
        %v1754 = vrot.slane %v1740, %v1753
        %v1755 = vcombine.high %v1747, %v1747
        %v1756 = vcombine.high %v1754, %v1754
        %v1765 = vsub.f32 %v1578, %v1730
        %v1766 = vsub.f32 %v1579, %v1738
        %v1767 = vsub.f32 %v1580, %v1737
        %v1768 = vsub.f32 %v1581, %v1739
        %v1769 = vsub.f32 %v1582, %v1747
        %v1770 = vsub.f32 %v1583, %v1755
        %v1771 = vsub.f32 %v1584, %v1754
        %v1772 = vsub.f32 %v1585, %v1756
        %v1773 = vmul.f32 %v1765, %v1765
        %v1774 = vmul.f32 %v1766, %v1766
        %v1775 = vmul.f32 %v1767, %v1767
        %v1776 = vmul.f32 %v1768, %v1768
        %v1777 = vmul.f32 %v1769, %v1769
        %v1778 = vmul.f32 %v1770, %v1770
        %v1779 = vmul.f32 %v1771, %v1771
        %v1780 = vmul.f32 %v1772, %v1772
        %v1789 = vcombine.low %v1773, %v1774
        %v1790 = vcombine.low %v1775, %v1776
        %v1792 = vunpack.c.l.s4 1983009808
        %v1793 = vunpack.c.0.s8 %v1792
        %v1794 = vlaneseq
        %v1795 = vshrl.u32 %v1794, 7
        %v1796 = vsub.s32 %v1793, %v1795
        %v1797 = vrot.slane %v1789, %v1796
        %v1799 = vunpack.c.l.s4 1983009808
        %v1800 = vunpack.c.0.s8 %v1799
        %v1801 = vlaneseq
        %v1802 = vshrl.u32 %v1801, 7
        %v1803 = vsub.s32 %v1800, %v1802
        %v1804 = vrot.slane %v1790, %v1803
        %v1805 = vcombine.low %v1797, %v1804
        %v1806 = vcombine.low %v1777, %v1778
        %v1807 = vcombine.low %v1779, %v1780
        %v1809 = vunpack.c.l.s4 1983009808
        %v1810 = vunpack.c.0.s8 %v1809
        %v1811 = vlaneseq
        %v1812 = vshrl.u32 %v1811, 7
        %v1813 = vsub.s32 %v1810, %v1812
        %v1814 = vrot.slane %v1806, %v1813
        %v1816 = vunpack.c.l.s4 1983009808
        %v1817 = vunpack.c.0.s8 %v1816
        %v1818 = vlaneseq
        %v1819 = vshrl.u32 %v1818, 7
        %v1820 = vsub.s32 %v1817, %v1819
        %v1821 = vrot.slane %v1807, %v1820
        %v1822 = vcombine.low %v1814, %v1821
        %1825 = vmatprep.subr.mxu0 0.0
        %1826 = vmatpush1.msra.mxu0 %v1586
        %1827 = vmatprep.subr.mxu0 0.0
        %1828 = vmatpush1.msra.mxu0 %v1587
        %1829 = vmatprep.subr.mxu0 0.0
        %1830 = vmatpush1.msra.mxu0 %v1588
        %1831 = vmatprep.subr.mxu0 0.0
        %1832 = vmatpush1.msra.mxu0 %v1589
        %1833 = vmatprep.subr.mxu0 0.0
        %1834 = vmatpush1.msra.mxu0 %v1590
        %1835 = vmatprep.subr.mxu0 0.0
        %1836 = vmatpush1.msra.mxu0 %v1591
        %1837 = vmatprep.subr.mxu0 0.0
        %1838 = vmatpush1.msra.mxu0 %v1592
        %1839 = vmatprep.subr.mxu0 0.0
        %1840 = vmatpush1.msra.mxu0 %v1593
        %1841 = vmatprep.subr.mxu0 0.0
        %1842 = vmatpush1.msra.mxu0 %v1594
        %1843 = vmatprep.subr.mxu0 0.0
        %1844 = vmatpush1.msra.mxu0 %v1595
        %1845 = vmatprep.subr.mxu0 0.0
        %1846 = vmatpush1.msra.mxu0 %v1596
        %1847 = vmatprep.subr.mxu0 0.0
        %1848 = vmatpush1.msra.mxu0 %v1597
        %1849 = vmatprep.subr.mxu0 0.0
        %1850 = vmatpush1.msra.mxu0 %v1598
        %1851 = vmatprep.subr.mxu0 0.0
        %1852 = vmatpush1.msra.mxu0 %v1599
        %1853 = vmatprep.subr.mxu0 0.0
        %1854 = vmatpush1.msra.mxu0 %v1600
        %1855 = vmatprep.subr.mxu0 0.0
        %1856 = vmatpush1.msra.mxu0 %v1601
        %1857 = vmatprep.subr.mxu0 0.0
        %1858 = vmatpush1.msra.mxu0 0.0
        %1859 = vmatprep.subr.mxu0 0.0
        %1860 = vmatpush1.msra.mxu0 0.0
        %1861 = vmatprep.subr.mxu0 0.0
        %1862 = vmatpush1.msra.mxu0 0.0
        %1863 = vmatprep.subr.mxu0 0.0
        %1864 = vmatpush1.msra.mxu0 0.0
        %1865 = vmatprep.subr.mxu0 0.0
        %1866 = vmatpush1.msra.mxu0 0.0
        %1867 = vmatprep.subr.mxu0 0.0
        %1868 = vmatpush1.msra.mxu0 0.0
        %1869 = vmatprep.subr.mxu0 0.0
        %1870 = vmatpush1.msra.mxu0 0.0
        %1871 = vmatprep.subr.mxu0 0.0
        %1872 = vmatpush1.msra.mxu0 0.0
        %1873 = vmatprep.subr.mxu0 0.0
        %1874 = vmatpush1.msra.mxu0 0.0
        %1875 = vmatprep.subr.mxu0 0.0
        %1876 = vmatpush1.msra.mxu0 0.0
        %1877 = vmatprep.subr.mxu0 0.0
        %1878 = vmatpush1.msra.mxu0 0.0
        %1879 = vmatprep.subr.mxu0 0.0
        %1880 = vmatpush1.msra.mxu0 0.0
        %1881 = vmatprep.subr.mxu0 0.0
        %1882 = vmatpush1.msra.mxu0 0.0
        %1883 = vmatprep.subr.mxu0 0.0
        %1884 = vmatpush1.msra.mxu0 0.0
        %1885 = vmatprep.subr.mxu0 0.0
        %1886 = vmatpush1.msra.mxu0 0.0
        %1887 = vmatprep.subr.mxu0 0.0
        %1888 = vmatpush1.msra.mxu0 0.0
        %1889 = vmatprep.mubr.f32.mxu0 0.0
        %1890 = vmatmul.mubr.f32.gmra.mrb[0].mxu0 %v1805
        %v1891 = vpop.f32.mrb[0].mxu0
        %v1892 = vadd.f32 1e-05, %v1891
        %v1893 = vpop.f32.mrb[0].mxu0
        %1894 = vmatprep.mubr.f32.mxu0 0.0
        %1895 = vmatmul.mubr.f32.gmra.mrb[0].mxu0 %v1822
        %v1896 = vpop.f32.mrb[0].mxu0
        %v1897 = vadd.f32 1e-05, %v1896
        %v1898 = vpop.f32.mrb[0].mxu0
        %1899 = vdwg.mxu0
        %v1900 = vrsqrt.pop %v1892
        %v1901 = vrsqrt.pop %v1897
        %v1904 = vcombine.high %v1900, %v1900
        %v1906 = vunpack.c.l.s4 1983009808
        %v1907 = vunpack.c.0.s8 %v1906
        %v1908 = vlaneseq
        %v1909 = vshrl.u32 %v1908, 7
        %v1910 = vsub.s32 %v1907, %v1909
        %v1911 = vrot.slane %v1900, %v1910
        %v1913 = vunpack.c.l.s4 1983009808
        %v1914 = vunpack.c.0.s8 %v1913
        %v1915 = vlaneseq
        %v1916 = vshrl.u32 %v1915, 7
        %v1917 = vsub.s32 %v1914, %v1916
        %v1918 = vrot.slane %v1904, %v1917
        %v1919 = vcombine.high %v1911, %v1911
        %v1920 = vcombine.high %v1918, %v1918
        %v1921 = vcombine.high %v1901, %v1901
        %v1923 = vunpack.c.l.s4 1983009808
        %v1924 = vunpack.c.0.s8 %v1923
        %v1925 = vlaneseq
        %v1926 = vshrl.u32 %v1925, 7
        %v1927 = vsub.s32 %v1924, %v1926
        %v1928 = vrot.slane %v1901, %v1927
        %v1930 = vunpack.c.l.s4 1983009808
        %v1931 = vunpack.c.0.s8 %v1930
        %v1932 = vlaneseq
        %v1933 = vshrl.u32 %v1932, 7
        %v1934 = vsub.s32 %v1931, %v1933
        %v1935 = vrot.slane %v1921, %v1934
        %v1936 = vcombine.high %v1928, %v1928
        %v1937 = vcombine.high %v1935, %v1935
        %v1946 = vmul.f32 %v1765, %v1911
        %v1947 = vmul.f32 %v1766, %v1919
        %v1948 = vmul.f32 %v1767, %v1918
        %v1949 = vmul.f32 %v1768, %v1920
        %v1950 = vmul.f32 %v1769, %v1928
        %v1951 = vmul.f32 %v1770, %v1936
        %v1952 = vmul.f32 %v1771, %v1935
        %v1953 = vmul.f32 %v1772, %v1937
        %v1954 = vld [vmem:[%s796] sm:$0x1]
        %v1956 = vlaneseq
        %v1957 = vshrl.u32 %v1956, 7
        %v1958 = vsub.s32 0, %v1957
        %v1959 = vrot.slane %v1954, %v1958
        %v1960 = vcombine.high %v1959, %v1959
        %v1962 = vunpack.c.l.s4 1983009808
        %v1963 = vunpack.c.0.s8 %v1962
        %v1964 = vlaneseq
        %v1965 = vshrl.u32 %v1964, 7
        %v1966 = vsub.s32 %v1963, %v1965
        %v1967 = vrot.slane %v1959, %v1966
        %v1969 = vunpack.c.l.s4 1983009808
        %v1970 = vunpack.c.0.s8 %v1969
        %v1971 = vlaneseq
        %v1972 = vshrl.u32 %v1971, 7
        %v1973 = vsub.s32 %v1970, %v1972
        %v1974 = vrot.slane %v1960, %v1973
        %v1975 = vcombine.high %v1967, %v1967
        %v1976 = vcombine.high %v1974, %v1974
        %v1981 = vmul.f32 %v1946, %v1967
        %v1982 = vmul.f32 %v1947, %v1975
        %v1983 = vmul.f32 %v1948, %v1974
        %v1984 = vmul.f32 %v1949, %v1976
        %v1985 = vmul.f32 %v1950, %v1967
        %v1986 = vmul.f32 %v1951, %v1975
        %v1987 = vmul.f32 %v1952, %v1974
        %v1988 = vmul.f32 %v1953, %v1976
        %v1989 = vld [vmem:[%s799] sm:$0x1]
        %v1991 = vlaneseq
        %v1992 = vshrl.u32 %v1991, 7
        %v1993 = vsub.s32 0, %v1992
        %v1994 = vrot.slane %v1989, %v1993
        %v1995 = vcombine.high %v1994, %v1994
        %v1997 = vunpack.c.l.s4 1983009808
        %v1998 = vunpack.c.0.s8 %v1997
        %v1999 = vlaneseq
        %v2000 = vshrl.u32 %v1999, 7
        %v2001 = vsub.s32 %v1998, %v2000
        %v2002 = vrot.slane %v1994, %v2001
        %v2004 = vunpack.c.l.s4 1983009808
        %v2005 = vunpack.c.0.s8 %v2004
        %v2006 = vlaneseq
        %v2007 = vshrl.u32 %v2006, 7
        %v2008 = vsub.s32 %v2005, %v2007
        %v2009 = vrot.slane %v1995, %v2008
        %v2010 = vcombine.high %v2002, %v2002
        %v2011 = vcombine.high %v2009, %v2009
        %v2016 = vadd.f32 %v1981, %v2002
        %v2017 = vadd.f32 %v1982, %v2010
        %v2018 = vadd.f32 %v1983, %v2009
        %v2019 = vadd.f32 %v1984, %v2011
        %v2020 = vadd.f32 %v1985, %v2002
        %v2021 = vadd.f32 %v1986, %v2010
        %v2022 = vadd.f32 %v1987, %v2009
        %v2023 = vadd.f32 %v1988, %v2011
        %v2024 = vmax.f32 %v2016, 0.0
        %v2025 = vmax.f32 %v2017, 0.0
        %v2026 = vmax.f32 %v2018, 0.0
        %v2027 = vmax.f32 %v2019, 0.0
        %v2028 = vmax.f32 %v2020, 0.0
        %v2029 = vmax.f32 %v2021, 0.0
        %v2030 = vmax.f32 %v2022, 0.0
        %v2031 = vmax.f32 %v2023, 0.0
        %v2040 = vcombine.low %v2024, %v2025
        %v2041 = vcombine.low %v2026, %v2027
        %v2043 = vunpack.c.l.s4 1983009808
        %v2044 = vunpack.c.0.s8 %v2043
        %v2045 = vlaneseq
        %v2046 = vshrl.u32 %v2045, 7
        %v2047 = vsub.s32 %v2044, %v2046
        %v2048 = vrot.slane %v2040, %v2047
        %v2050 = vunpack.c.l.s4 1983009808
        %v2051 = vunpack.c.0.s8 %v2050
        %v2052 = vlaneseq
        %v2053 = vshrl.u32 %v2052, 7
        %v2054 = vsub.s32 %v2051, %v2053
        %v2055 = vrot.slane %v2041, %v2054
        %v2056 = vcombine.low %v2048, %v2055
        %v2057 = vcombine.low %v2028, %v2029
        %v2058 = vcombine.low %v2030, %v2031
        %v2060 = vunpack.c.l.s4 1983009808
        %v2061 = vunpack.c.0.s8 %v2060
        %v2062 = vlaneseq
        %v2063 = vshrl.u32 %v2062, 7
        %v2064 = vsub.s32 %v2061, %v2063
        %v2065 = vrot.slane %v2057, %v2064
        %v2067 = vunpack.c.l.s4 1983009808
        %v2068 = vunpack.c.0.s8 %v2067
        %v2069 = vlaneseq
        %v2070 = vshrl.u32 %v2069, 7
        %v2071 = vsub.s32 %v2068, %v2070
        %v2072 = vrot.slane %v2058, %v2071
        %v2073 = vcombine.low %v2065, %v2072
        %v2076 = vadd.f32 %v818, %v2056
        %v2077 = vadd.f32 %v819, %v2073
        %2078 = vst [vmem:[%s782] sm:$0xff] %v2076
        %2079 = vst [vmem:[%s782 + $0x8] sm:$0xff] %v2077
        %v2080 = vxor.u32 %v2076, 2147483648
        %v2081 = vxor.u32 %v2077, 2147483648
        %v2082 = vmul.f32 %v2080, 1.442695
        %v2083 = vpow.pop %v2082
        %v2084 = vmul.f32 %v2081, 1.442695
        %v2085 = vpow.pop %v2084
        %v2086 = vadd.f32 %v2083, 1.0
        %v2087 = vadd.f32 %v2085, 1.0
        %v2088 = vrcp.pop %v2086
        %v2089 = vmul.f32 1.0, %v2088
        %v2090 = vrcp.pop %v2087
        %v2091 = vmul.f32 1.0, %v2090
        %v2092 = vmul.f32 %v2089, 1.442695
        %v2093 = vpow.pop %v2092
        %v2094 = vmul.f32 %v2091, 1.442695
        %v2095 = vpow.pop %v2094
        %v2098 = vcombine.high %v2093, %v2093
        %v2100 = vunpack.c.l.s4 1983009808
        %v2101 = vunpack.c.0.s8 %v2100
        %v2102 = vlaneseq
        %v2103 = vshrl.u32 %v2102, 7
        %v2104 = vsub.s32 %v2101, %v2103
        %v2105 = vrot.slane %v2093, %v2104
        %v2107 = vunpack.c.l.s4 1983009808
        %v2108 = vunpack.c.0.s8 %v2107
        %v2109 = vlaneseq
        %v2110 = vshrl.u32 %v2109, 7
        %v2111 = vsub.s32 %v2108, %v2110
        %v2112 = vrot.slane %v2098, %v2111
        %v2113 = vcombine.high %v2105, %v2105
        %v2114 = vcombine.high %v2112, %v2112
        %v2115 = vcombine.high %v2095, %v2095
        %v2117 = vunpack.c.l.s4 1983009808
        %v2118 = vunpack.c.0.s8 %v2117
        %v2119 = vlaneseq
        %v2120 = vshrl.u32 %v2119, 7
        %v2121 = vsub.s32 %v2118, %v2120
        %v2122 = vrot.slane %v2095, %v2121
        %v2124 = vunpack.c.l.s4 1983009808
        %v2125 = vunpack.c.0.s8 %v2124
        %v2126 = vlaneseq
        %v2127 = vshrl.u32 %v2126, 7
        %v2128 = vsub.s32 %v2125, %v2127
        %v2129 = vrot.slane %v2115, %v2128
        %v2130 = vcombine.high %v2122, %v2122
        %v2131 = vcombine.high %v2129, %v2129
        %vm2140 = vcmask 1041408
        %v2141 = vsel %vm2140, %v2105, 0.0
        %v2142 = vrot.slane %v2141, 4
        %v2143 = vadd.f32 %v2141, %v2142
        %v2144 = vrot.slane %v2143, 2
        %v2145 = vadd.f32 %v2143, %v2144
        %v2146 = vrot.slane %v2145, 1
        %v2147 = vadd.f32 %v2145, %v2146
        %v2148 = vsel %vm2140, %v2113, 0.0
        %v2149 = vrot.slane %v2148, 4
        %v2150 = vadd.f32 %v2148, %v2149
        %v2151 = vrot.slane %v2150, 2
        %v2152 = vadd.f32 %v2150, %v2151
        %v2153 = vrot.slane %v2152, 1
        %v2154 = vadd.f32 %v2152, %v2153
        %v2155 = vsel %vm2140, %v2112, 0.0
        %v2156 = vrot.slane %v2155, 4
        %v2157 = vadd.f32 %v2155, %v2156
        %v2158 = vrot.slane %v2157, 2
        %v2159 = vadd.f32 %v2157, %v2158
        %v2160 = vrot.slane %v2159, 1
        %v2161 = vadd.f32 %v2159, %v2160
        %v2162 = vsel %vm2140, %v2114, 0.0
        %v2163 = vrot.slane %v2162, 4
        %v2164 = vadd.f32 %v2162, %v2163
        %v2165 = vrot.slane %v2164, 2
        %v2166 = vadd.f32 %v2164, %v2165
        %v2167 = vrot.slane %v2166, 1
        %v2168 = vadd.f32 %v2166, %v2167
        %v2169 = vsel %vm2140, %v2122, 0.0
        %v2170 = vrot.slane %v2169, 4
        %v2171 = vadd.f32 %v2169, %v2170
        %v2172 = vrot.slane %v2171, 2
        %v2173 = vadd.f32 %v2171, %v2172
        %v2174 = vrot.slane %v2173, 1
        %v2175 = vadd.f32 %v2173, %v2174
        %v2176 = vsel %vm2140, %v2130, 0.0
        %v2177 = vrot.slane %v2176, 4
        %v2178 = vadd.f32 %v2176, %v2177
        %v2179 = vrot.slane %v2178, 2
        %v2180 = vadd.f32 %v2178, %v2179
        %v2181 = vrot.slane %v2180, 1
        %v2182 = vadd.f32 %v2180, %v2181
        %v2183 = vsel %vm2140, %v2129, 0.0
        %v2184 = vrot.slane %v2183, 4
        %v2185 = vadd.f32 %v2183, %v2184
        %v2186 = vrot.slane %v2185, 2
        %v2187 = vadd.f32 %v2185, %v2186
        %v2188 = vrot.slane %v2187, 1
        %v2189 = vadd.f32 %v2187, %v2188
        %v2190 = vsel %vm2140, %v2131, 0.0
        %v2191 = vrot.slane %v2190, 4
        %v2192 = vadd.f32 %v2190, %v2191
        %v2193 = vrot.slane %v2192, 2
        %v2194 = vadd.f32 %v2192, %v2193
        %v2195 = vrot.slane %v2194, 1
        %v2196 = vadd.f32 %v2194, %v2195
        %v2197 = vmul.f32 %v2105, %v1337
        %v2198 = vmul.f32 %v2113, %v1337
        %v2199 = vmul.f32 %v2112, %v1337
        %v2200 = vmul.f32 %v2114, %v1337
        %v2201 = vmul.f32 %v2122, %v1337
        %v2202 = vmul.f32 %v2130, %v1337
        %v2203 = vmul.f32 %v2129, %v1337
        %v2204 = vmul.f32 %v2131, %v1337
        %v2205 = vsel %vm2140, %v2197, 0.0
        %v2206 = vrot.slane %v2205, 4
        %v2207 = vadd.f32 %v2205, %v2206
        %v2208 = vrot.slane %v2207, 2
        %v2209 = vadd.f32 %v2207, %v2208
        %v2210 = vrot.slane %v2209, 1
        %v2211 = vadd.f32 %v2209, %v2210
        %v2212 = vsel %vm2140, %v2198, 0.0
        %v2213 = vrot.slane %v2212, 4
        %v2214 = vadd.f32 %v2212, %v2213
        %v2215 = vrot.slane %v2214, 2
        %v2216 = vadd.f32 %v2214, %v2215
        %v2217 = vrot.slane %v2216, 1
        %v2218 = vadd.f32 %v2216, %v2217
        %v2219 = vsel %vm2140, %v2199, 0.0
        %v2220 = vrot.slane %v2219, 4
        %v2221 = vadd.f32 %v2219, %v2220
        %v2222 = vrot.slane %v2221, 2
        %v2223 = vadd.f32 %v2221, %v2222
        %v2224 = vrot.slane %v2223, 1
        %v2225 = vadd.f32 %v2223, %v2224
        %v2226 = vsel %vm2140, %v2200, 0.0
        %v2227 = vrot.slane %v2226, 4
        %v2228 = vadd.f32 %v2226, %v2227
        %v2229 = vrot.slane %v2228, 2
        %v2230 = vadd.f32 %v2228, %v2229
        %v2231 = vrot.slane %v2230, 1
        %v2232 = vadd.f32 %v2230, %v2231
        %v2233 = vsel %vm2140, %v2201, 0.0
        %v2234 = vrot.slane %v2233, 4
        %v2235 = vadd.f32 %v2233, %v2234
        %v2236 = vrot.slane %v2235, 2
        %v2237 = vadd.f32 %v2235, %v2236
        %v2238 = vrot.slane %v2237, 1
        %v2239 = vadd.f32 %v2237, %v2238
        %v2240 = vsel %vm2140, %v2202, 0.0
        %v2241 = vrot.slane %v2240, 4
        %v2242 = vadd.f32 %v2240, %v2241
        %v2243 = vrot.slane %v2242, 2
        %v2244 = vadd.f32 %v2242, %v2243
        %v2245 = vrot.slane %v2244, 1
        %v2246 = vadd.f32 %v2244, %v2245
        %v2247 = vsel %vm2140, %v2203, 0.0
        %v2248 = vrot.slane %v2247, 4
        %v2249 = vadd.f32 %v2247, %v2248
        %v2250 = vrot.slane %v2249, 2
        %v2251 = vadd.f32 %v2249, %v2250
        %v2252 = vrot.slane %v2251, 1
        %v2253 = vadd.f32 %v2251, %v2252
        %v2254 = vsel %vm2140, %v2204, 0.0
        %v2255 = vrot.slane %v2254, 4
        %v2256 = vadd.f32 %v2254, %v2255
        %v2257 = vrot.slane %v2256, 2
        %v2258 = vadd.f32 %v2256, %v2257
        %v2259 = vrot.slane %v2258, 1
        %v2260 = vadd.f32 %v2258, %v2259
        %vm2269 = vcmask 1041409
        %v2270 = vsel %vm2269, %v2154, %v2147
        %vm2271 = vcmask 1042434
        %v2272 = vsel %vm2271, %v2161, %v2270
        %vm2273 = vcmask 1043459
        %v2274 = vsel %vm2273, %v2168, %v2272
        %vm2275 = vcmask 1044484
        %v2276 = vsel %vm2275, %v2175, %v2274
        %vm2277 = vcmask 1045509
        %v2278 = vsel %vm2277, %v2182, %v2276
        %vm2279 = vcmask 1046534
        %v2280 = vsel %vm2279, %v2189, %v2278
        %vm2281 = vcmask 1047559
        %v2282 = vsel %vm2281, %v2196, %v2280
        %2284 = vrot.lane.b32.xlu0 %v2282, 32
        %v2285 = vpop.permute.xlu0 %2284
        %v2287 = vrot.slane %v2285, 1
        %v2288 = vrot.slane %v2285, 2
        %v2289 = vrot.slane %v2285, 3
        %v2290 = vrot.slane %v2285, 4
        %v2291 = vrot.slane %v2285, 5
        %v2292 = vrot.slane %v2285, 6
        %v2293 = vrot.slane %v2285, 7
        %v2302 = vadd.f32 %v2147, %v2285
        %v2303 = vadd.f32 %v2154, %v2287
        %v2304 = vadd.f32 %v2161, %v2288
        %v2305 = vadd.f32 %v2168, %v2289
        %v2306 = vadd.f32 %v2175, %v2290
        %v2307 = vadd.f32 %v2182, %v2291
        %v2308 = vadd.f32 %v2189, %v2292
        %v2309 = vadd.f32 %v2196, %v2293
        %v2318 = vrot.slane %v2303, 7
        %v2319 = vsel %vm2269, %v2318, %v2302
        %v2320 = vrot.slane %v2304, 6
        %v2321 = vsel %vm2271, %v2320, %v2319
        %v2322 = vrot.slane %v2305, 5
        %v2323 = vsel %vm2273, %v2322, %v2321
        %v2324 = vrot.slane %v2306, 4
        %v2325 = vsel %vm2275, %v2324, %v2323
        %v2326 = vrot.slane %v2307, 3
        %v2327 = vsel %vm2277, %v2326, %v2325
        %v2328 = vrot.slane %v2308, 2
        %v2329 = vsel %vm2279, %v2328, %v2327
        %v2330 = vrot.slane %v2309, 1
        %v2331 = vsel %vm2281, %v2330, %v2329
        %2333 = vrot.lane.b32.xlu0 %v2331, 64
        %v2334 = vpop.permute.xlu0 %2333
        %v2336 = vrot.slane %v2334, 1
        %v2337 = vrot.slane %v2334, 2
        %v2338 = vrot.slane %v2334, 3
        %v2339 = vrot.slane %v2334, 4
        %v2340 = vrot.slane %v2334, 5
        %v2341 = vrot.slane %v2334, 6
        %v2342 = vrot.slane %v2334, 7
        %v2351 = vadd.f32 %v2302, %v2334
        %v2352 = vadd.f32 %v2303, %v2336
        %v2353 = vadd.f32 %v2304, %v2337
        %v2354 = vadd.f32 %v2305, %v2338
        %v2355 = vadd.f32 %v2306, %v2339
        %v2356 = vadd.f32 %v2307, %v2340
        %v2357 = vadd.f32 %v2308, %v2341
        %v2358 = vadd.f32 %v2309, %v2342
        %v2367 = vsel %vm2269, %v2218, %v2211
        %v2368 = vsel %vm2271, %v2225, %v2367
        %v2369 = vsel %vm2273, %v2232, %v2368
        %v2370 = vsel %vm2275, %v2239, %v2369
        %v2371 = vsel %vm2277, %v2246, %v2370
        %v2372 = vsel %vm2279, %v2253, %v2371
        %v2373 = vsel %vm2281, %v2260, %v2372
        %2375 = vrot.lane.b32.xlu0 %v2373, 32
        %v2376 = vpop.permute.xlu0 %2375
        %v2378 = vrot.slane %v2376, 1
        %v2379 = vrot.slane %v2376, 2
        %v2380 = vrot.slane %v2376, 3
        %v2381 = vrot.slane %v2376, 4
        %v2382 = vrot.slane %v2376, 5
        %v2383 = vrot.slane %v2376, 6
        %v2384 = vrot.slane %v2376, 7
        %v2393 = vadd.f32 %v2211, %v2376
        %v2394 = vadd.f32 %v2218, %v2378
        %v2395 = vadd.f32 %v2225, %v2379
        %v2396 = vadd.f32 %v2232, %v2380
        %v2397 = vadd.f32 %v2239, %v2381
        %v2398 = vadd.f32 %v2246, %v2382
        %v2399 = vadd.f32 %v2253, %v2383
        %v2400 = vadd.f32 %v2260, %v2384
        %v2409 = vrot.slane %v2394, 7
        %v2410 = vsel %vm2269, %v2409, %v2393
        %v2411 = vrot.slane %v2395, 6
        %v2412 = vsel %vm2271, %v2411, %v2410
        %v2413 = vrot.slane %v2396, 5
        %v2414 = vsel %vm2273, %v2413, %v2412
        %v2415 = vrot.slane %v2397, 4
        %v2416 = vsel %vm2275, %v2415, %v2414
        %v2417 = vrot.slane %v2398, 3
        %v2418 = vsel %vm2277, %v2417, %v2416
        %v2419 = vrot.slane %v2399, 2
        %v2420 = vsel %vm2279, %v2419, %v2418
        %v2421 = vrot.slane %v2400, 1
        %v2422 = vsel %vm2281, %v2421, %v2420
        %2424 = vrot.lane.b32.xlu0 %v2422, 64
        %v2425 = vpop.permute.xlu0 %2424
        %v2427 = vrot.slane %v2425, 1
        %v2428 = vrot.slane %v2425, 2
        %v2429 = vrot.slane %v2425, 3
        %v2430 = vrot.slane %v2425, 4
        %v2431 = vrot.slane %v2425, 5
        %v2432 = vrot.slane %v2425, 6
        %v2433 = vrot.slane %v2425, 7
        %v2442 = vadd.f32 %v2393, %v2425
        %v2443 = vadd.f32 %v2394, %v2427
        %v2444 = vadd.f32 %v2395, %v2428
        %v2445 = vadd.f32 %v2396, %v2429
        %v2446 = vadd.f32 %v2397, %v2430
        %v2447 = vadd.f32 %v2398, %v2431
        %v2448 = vadd.f32 %v2399, %v2432
        %v2449 = vadd.f32 %v2400, %v2433
        %v2450 = vrcp.pop %v2351
        %v2451 = vrcp.pop %v2352
        %v2452 = vrcp.pop %v2353
        %v2453 = vrcp.pop %v2354
        %v2454 = vrcp.pop %v2355
        %v2455 = vrcp.pop %v2356
        %v2456 = vrcp.pop %v2357
        %v2457 = vrcp.pop %v2358
        %v2458 = vmul.f32 %v2442, %v2450
        %v2459 = vmul.f32 %v2443, %v2451
        %v2460 = vmul.f32 %v2444, %v2452
        %v2461 = vmul.f32 %v2445, %v2453
        %v2462 = vmul.f32 %v2446, %v2454
        %v2463 = vmul.f32 %v2447, %v2455
        %v2464 = vmul.f32 %v2448, %v2456
        %v2465 = vmul.f32 %v2449, %v2457
        %v2466 = vmul.f32 %v2458, 0.125
        %v2467 = vmul.f32 %v2459, 0.125
        %v2468 = vmul.f32 %v2460, 0.125
        %v2469 = vmul.f32 %v2461, 0.125
        %v2470 = vmul.f32 %v2462, 0.125
        %v2471 = vmul.f32 %v2463, 0.125
        %v2472 = vmul.f32 %v2464, 0.125
        %v2473 = vmul.f32 %v2465, 0.125
        %v2482 = vrot.slane %v2467, 7
        %v2483 = vsel %vm2269, %v2482, %v2466
        %v2484 = vrot.slane %v2468, 6
        %v2485 = vsel %vm2271, %v2484, %v2483
        %v2486 = vrot.slane %v2469, 5
        %v2487 = vsel %vm2273, %v2486, %v2485
        %v2488 = vrot.slane %v2470, 4
        %v2489 = vsel %vm2275, %v2488, %v2487
        %v2490 = vrot.slane %v2471, 3
        %v2491 = vsel %vm2277, %v2490, %v2489
        %v2492 = vrot.slane %v2472, 2
        %v2493 = vsel %vm2279, %v2492, %v2491
        %v2494 = vrot.slane %v2473, 1
        %v2495 = vsel %vm2281, %v2494, %v2493
        %v2497 = vadd.f32 %v913, %v2495
        %v2498 = vsel %vm840, %v2497, 0.0
        %2499 = vadd.xlane.f32.xlu0 %v2498
        %v2500 = vpop.xlane.xlu0 %2499
        %v2501 = vrcp.pop 32.0
        %v2502 = vmul.f32 %v2500, %v2501
        %v2503 = vsub.f32 %v2497, %v2502
        %v2504 = vmul.f32 %v2503, %v2503
        %v2505 = vsel %vm840, %v2504, 0.0
        %2506 = vadd.xlane.f32.xlu0 %v2505
        %v2507 = vpop.xlane.xlu0 %2506
        %v2508 = vmul.f32 %v2507, %v2501
        %v2509 = vadd.f32 %v2508, 1e-05
        %v2510 = vrsqrt.pop %v2509
        %v2511 = vmul.f32 %v2503, %v2510
        %v2512 = vld [vmem:[%s802] sm:$0x1]
        %v2514 = vlaneseq
        %v2515 = vshrl.u32 %v2514, 7
        %v2516 = vsub.s32 0, %v2515
        %v2517 = vrot.slane %v2512, %v2516
        %v2519 = vmul.f32 %v2511, %v2517
        %v2520 = vld [vmem:[%s805] sm:$0x1]
        %v2522 = vlaneseq
        %v2523 = vshrl.u32 %v2522, 7
        %v2524 = vsub.s32 0, %v2523
        %v2525 = vrot.slane %v2520, %v2524
        %v2527 = vadd.f32 %v2519, %v2525
        %v2528 = vmax.f32 %v2527, 0.0
        %v2529 = vadd.f32 %v817, %v2528
        %2530 = vst.msk [vmem:[%s775] sm:$0xff] %vm840, %v2529
        %s2531 = sand.u32 %s417, 1
        %s2532 = scalar_lea.sflag [#allocation4], %s2531
        %s2533 = sand.u32 %s417, 1
        %s2534 = smul.addr %s2533, 8
        %s2535 = scalar_lea.vmem [#allocation13], %s2534
        %s2536 = sand.u32 %s443, 1
        %s2537 = scalar_lea.sflag [#allocation15], %s2536
        %s2538 = sand.u32 %s443, 1
        %s2539 = smul.addr %s2538, 16
        %s2540 = scalar_lea.vmem [#allocation14], %s2539
        // Predicated region
        $region105: #{tpu_custom_call.1} parent=75 // pred_check
          %p2541 = pneg %p427
        $region106: #{tpu_custom_call.1} parent=75 // pred_check_branch
          %2543 = sbr.rel (%p2541) target = $region108
        $region107: #{tpu_custom_call.1} parent=75 // pred_region
          %s2545 = ssub.s32 128, 128
          %2546 = vsyncadd %s2532, %s2545
          %s2547 = smul.addr %s47, 128
          %s2548 = scalar_lea.hbm %s14, %s2547
          %s2550 = sshll.u32 %s2535, 4
          %s2551 = int_to_ptr.vmem [resolvable:$true] %s2550
          %2553 = dma.vmem_to_hbm [thread:$0]  %s2551, 128, %s2548, %s2532
        $region108: #{tpu_custom_call.1} parent=75 // pred_fallthru
          _
        // Predicated region
        $region109: #{tpu_custom_call.1} parent=75 // pred_check
          %p2554 = pneg %p453
        $region110: #{tpu_custom_call.1} parent=75 // pred_check_branch
          %2556 = sbr.rel (%p2554) target = $region112
        $region111: #{tpu_custom_call.1} parent=75 // pred_region
          %s2558 = ssub.s32 256, 256
          %2559 = vsyncadd %s2537, %s2558
          %s2560 = smul.addr %s47, 2
          %s2561 = smul.addr %s2560, 128
          %s2562 = scalar_lea.hbm %s15, %s2561
          %s2563 = sshll.u32 %s2540, 4
          %s2564 = int_to_ptr.vmem [resolvable:$true] %s2563
          %2569 = dma.vmem_to_hbm [thread:$0]  %s2564, 256, %s2562, %s2537, 128, 128, 8
        $region112: #{tpu_custom_call.1} parent=75 // pred_fallthru
          _
      $region76: #{tpu_custom_call.1} parent=5 // pred_fallthru
        _
      %p2570 = scmp.le.s32.totalorder 2, %s38
      // Predicated region
      $region113: #{tpu_custom_call.1} parent=5 // pred_check
        %p2571 = pneg %p2570
      $region114: #{tpu_custom_call.1} parent=5 // pred_check_branch
        %2573 = sbr.rel (%p2571) target = $region116
      $region115: #{tpu_custom_call.1} parent=5 // pred_region
        %s2574 = ssub.s32 %s38, 2
        // Predicated region
        $region117: #{tpu_custom_call.1} parent=115 // pred_check
          %p2575 = pneg %p433
        $region118: #{tpu_custom_call.1} parent=115 // pred_check_branch
          %2577 = sbr.rel (%p2575) target = $region120
        $region119: #{tpu_custom_call.1} parent=115 // pred_region
          %s2578 = sand.u32 %s418, 1
          %s2579 = scalar_lea.sflag [#allocation4], %s2578
          %s2580 = sand.u32 %s418, 1
          %s2581 = smul.addr %s2580, 8
          %s2582 = scalar_lea.vmem [#allocation13], %s2581
          %2583 = dma.done %s2579, 128
        $region120: #{tpu_custom_call.1} parent=115 // pred_fallthru
          _
        // Predicated region
        $region121: #{tpu_custom_call.1} parent=115 // pred_check
          %p2584 = pneg %p459
        $region122: #{tpu_custom_call.1} parent=115 // pred_check_branch
          %2586 = sbr.rel (%p2584) target = $region124
        $region123: #{tpu_custom_call.1} parent=115 // pred_region
          %s2587 = sand.u32 %s444, 1
          %s2588 = scalar_lea.sflag [#allocation15], %s2587
          %s2589 = sand.u32 %s444, 1
          %s2590 = smul.addr %s2589, 16
          %s2591 = scalar_lea.vmem [#allocation14], %s2590
          %2592 = dma.done %s2588, 256
        $region124: #{tpu_custom_call.1} parent=115 // pred_fallthru
          _
      $region116: #{tpu_custom_call.1} parent=5 // pred_fallthru
        _
    $region6: #{tpu_custom_call.1} parent=1 // loop_footer
      %s42 = sadd.s32 1, %s38
    $region7: #{tpu_custom_call.1} parent=1 // loop_footer_branch
      %37 = sbr.rel target = $region3
    $region8: #{tpu_custom_call.1} parent=1 // loop_exit
      _
    %2593 = vsyncpa [#allocation3], 1
    %s2594 = scalar_lea.sflag [#allocation3], 1
    %2595 = vsyncpa %s2594, 1
    %2596 = vsyncpa [#allocation6], 1
    %s2597 = scalar_lea.sflag [#allocation6], 1
    %2598 = vsyncpa %s2597, 1
    %2599 = vsyncpa [#allocation9], 1
    %s2600 = scalar_lea.sflag [#allocation9], 1
    %2601 = vsyncpa %s2600, 1
    %2602 = vsyncpa [#allocation12], 1
    %2603 = vsyncpa [#allocation4], 1
    %s2604 = scalar_lea.sflag [#allocation4], 1
    %2605 = vsyncpa %s2604, 1
    %2606 = vsyncpa [#allocation15], 1
    %s2607 = scalar_lea.sflag [#allocation15], 1
    %2608 = vsyncpa %s2607, 1

</llo_original>
